<compile_context>
chip_gen: v5e
topology: v5e:2x2
jax: 0.10.0
libtpu: 0.0.40
codegen_flags: <defaults>
</compile_context>

<pallas_src>
import numpy as np
import jax
import jax.numpy as jnp
from jax import lax
from jax.experimental import pallas as pl
from jax.experimental.pallas import tpu as pltpu

# ---------------- small synthetic shapes (module values in comments) ----------------
B = 2        # batch of questions
D = 32       # tkg_embedding_dim            (module: 200 -> pad to 256)
SD = 768     # sentence embedding dim       (DistilBERT hidden size)
NE = 256     # num entities                 (module: 20575 -> pad to 20608)
NR = 16      # num relations
NT = 4       # num timestamps
GAMMA = 0.8  # propagation decay
TE = 128     # edge tile (lanes) for kernel A and edge axis of kernel B
TN = 128     # entity-column tile for kernel B

assert NE % TN == 0


# =============  Kernel A: per-edge projections + score_network_tango  =============
# Feature layout: (D, TE) blocks, edges along lanes. Weights are pre-transposed on
# the host so scores come out lane-dense as (1, TE).
def _edge_score_kernel(head_ref, t1_ref, t2_ref, r1_ref, r2_ref, qt_ref, m2_ref,
                       weT_ref, beT_ref, wrT_ref, brT_ref, w1T_ref, w2T_ref, b2_ref,
                       s1_ref, s2_ref):
    dot = lambda a, b: jnp.dot(a, b, preferred_element_type=jnp.float32)

    # linear_entity / linear_relation (transposed): (D,D) @ (D,TE) + (D,1)
    s = dot(weT_ref[...], head_ref[...]) + beT_ref[...]
    n1 = dot(weT_ref[...], t1_ref[...]) + beT_ref[...]
    n2 = dot(weT_ref[...], t2_ref[...]) + beT_ref[...]
    r1 = dot(wrT_ref[...], r1_ref[...]) + brT_ref[...]
    r2 = dot(wrT_ref[...], r2_ref[...]) + brT_ref[...]
    qt = qt_ref[...]   # hoisted question term: W1[3D:4D].T @ linear_question(q) + b1

    def score_net(a, b, c):
        # concat(a|b|c) on sublanes -> single K=3D matmul; question slice of W1 and
        # b1 are already folded into qt (identical for both score_net calls).
        h = dot(w1T_ref[...], jnp.concatenate([a, b, c], axis=0)) + qt
        h = jnp.maximum(h, 0.0)                       # ReLU
        return dot(w2T_ref[...], h) + b2_ref[...]     # (1, TE) lane-dense

    s1_ref[...] = score_net(s, r1, n1)                    # 1-hop score
    s2_ref[...] = score_net(n1, r2, n2) * m2_ref[...]     # 2-hop score * masks_two


def edge_scores(head_T, t1_T, t2_T, r1_T, r2_T, qt_T, m2_row, wp):
    e_pad = head_T.shape[1]
    assert e_pad % TE == 0
    grid = (e_pad // TE,)
    edge_D = pl.BlockSpec((D, TE), lambda i: (0, i))
    edge_1 = pl.BlockSpec((1, TE), lambda i: (0, i))
    full = lambda shape: pl.BlockSpec(shape, lambda i: (0, 0))
    in_specs = [edge_D, edge_D, edge_D, edge_D, edge_D,   # head, t1, t2, r1, r2
                edge_D, edge_1,                           # q_term, masks_two
                full((D, D)), full((D, 1)),               # linear_entity (transposed)
                full((D, D)), full((D, 1)),               # linear_relation (transposed)
                full((D, 3 * D)),                         # W1[:3D].T
                full((1, D)), full((1, 1))]               # score_cat_layer_two (transposed)
    out_specs = (edge_1, edge_1)
    out_shape = (jax.ShapeDtypeStruct((1, e_pad), jnp.float32),
                 jax.ShapeDtypeStruct((1, e_pad), jnp.float32))
    return pl.pallas_call(
        _edge_score_kernel,
        grid=grid,
        in_specs=in_specs,
        out_specs=out_specs,
        out_shape=out_shape,
        compiler_params=pltpu.CompilerParams(dimension_semantics=("parallel",)),
    )(head_T, t1_T, t2_T, r1_T, r2_T, qt_T, m2_row,
      wp["WeT"], wp["beT"], wp["WrT"], wp["brT"], wp["W1abcT"], wp["W2T"], wp["b2"])


# ===========  Kernel B: tiled scatter_mean (MXU) + tango propagation  ===========
# grid = (batch, entity-column tile, edge tile); edge tile is the reduction axis.
def _scatter_prop_kernel(s1_ref, s2_ref, t1_ref, t2_ref, eb_ref,
                         scores_ref, acc1, acc2):
    b = pl.program_id(0)
    nt = pl.program_id(1)
    et = pl.program_id(2)

    @pl.when(et == 0)
    def _():
        acc1[...] = jnp.zeros_like(acc1)
        acc2[...] = jnp.zeros_like(acc2)

    # One-hot over this entity-column tile. Padded edges carry eb == B (never
    # matches a real batch id) and tails == NE (never matches an entity column),
    # so they contribute nothing.
    ent_ids = nt * TN + lax.broadcasted_iota(jnp.int32, (TE, TN), 1)
    in_b = eb_ref[...] == b                                              # (TE, 1)
    oh1 = jnp.logical_and(ent_ids == t1_ref[...], in_b).astype(jnp.float32)
    oh2 = jnp.logical_and(ent_ids == t2_ref[...], in_b).astype(jnp.float32)

    # scatter-sum + count on the MXU: [score ; ones] @ one_hot -> (2, TN)
    ones = jnp.ones((1, TE), jnp.float32)
    lhs1 = jnp.concatenate([s1_ref[...], ones], axis=0)                  # (2, TE)
    lhs2 = jnp.concatenate([s2_ref[...], ones], axis=0)
    acc1[...] += jnp.dot(lhs1, oh1, preferred_element_type=jnp.float32)
    acc2[...] += jnp.dot(lhs2, oh2, preferred_element_type=jnp.float32)

    @pl.when(et == pl.num_programs(2) - 1)
    def _():
        mean1 = acc1[0:1, :] / jnp.maximum(acc1[1:2, :], 1.0)
        mean2 = acc2[0:1, :] / jnp.maximum(acc2[1:2, :], 1.0)
        out_one = GAMMA * 1.0 + mean1           # tango: out_init = ones
        final = GAMMA * out_one + mean2
        # exact ==0 compare mirrors torch `final_score[final_score == 0] = -99999`
        final = jnp.where(final == 0.0, jnp.float32(-99999.0), final)
        scores_ref[...] = final                 # single full lane-dense (1, TN) store


def propagate_scores(s1, s2, tails1, tails2, edge_batch_col):
    e_pad = s1.shape[1]
    grid = (B, NE // TN, e_pad // TE)
    edge_row = pl.BlockSpec((1, TE), lambda b, nt, et: (0, et))
    edge_col = pl.BlockSpec((TE, 1), lambda b, nt, et: (et, 0))
    return pl.pallas_call(
        _scatter_prop_kernel,
        grid=grid,
        in_specs=[edge_row, edge_row, edge_col, edge_col, edge_col],
        out_specs=pl.BlockSpec((1, TN), lambda b, nt, et: (b, nt)),
        out_shape=jax.ShapeDtypeStruct((B, NE), jnp.float32),
        scratch_shapes=[pltpu.VMEM((2, TN), jnp.float32),   # [sum1; cnt1]
                        pltpu.VMEM((2, TN), jnp.float32)],  # [sum2; cnt2]
        compiler_params=pltpu.CompilerParams(
            dimension_semantics=("parallel", "parallel", "arbitrary")),
    )(s1, s2, tails1, tails2, edge_batch_col)


# ===================  Kernel C: CrossEntropyLoss(reduction='sum')  ===================
def _ce_loss_kernel(scores_ref, ans_ref, loss_ref):
    sc = scores_ref[...]                                           # (B, NE)
    m = jnp.max(sc, axis=1, keepdims=True)
    lse = m + jnp.log(jnp.sum(jnp.exp(sc - m), axis=1, keepdims=True))
    ids = lax.broadcasted_iota(jnp.int32, sc.shape, 1)
    ans_score = jnp.sum(jnp.where(ids == ans_ref[...], sc, 0.0),
                        axis=1, keepdims=True)
    loss_ref[...] = jnp.sum(lse - ans_score, axis=0, keepdims=True)


def ce_loss_sum(scores, answers_col):
    vmem = pltpu.MemorySpace.VMEM
    return pl.pallas_call(
        _ce_loss_kernel,
        in_specs=[pl.BlockSpec(memory_space=vmem), pl.BlockSpec(memory_space=vmem)],
        out_specs=pl.BlockSpec(memory_space=vmem),
        out_shape=jax.ShapeDtypeStruct((1, 1), jnp.float32),
    )(scores, answers_col)


# ===================================  driver  ===================================
if __name__ == "__main__":
    key = jax.random.PRNGKey(0)
    ks = jax.random.split(key, 16)

    # tango-style TKG embedding table: [timestamp, entity|relation, dim]
    tkg_emb = 0.1 * jax.random.normal(ks[0], (NT, NE + NR, D), jnp.float32)
    # TODO(synk): DistilBERT question encoder not ported; CLS features are synthetic (B, 768).
    q_feat = 0.1 * jax.random.normal(ks[1], (B, SD), jnp.float32)

    def linear_init(k, fan_in, fan_out):
        k1, k2 = jax.random.split(k)
        lim = 1.0 / np.sqrt(fan_in)
        w = jax.random.uniform(k1, (fan_in, fan_out), jnp.float32, -lim, lim)
        b = jax.random.uniform(k2, (1, fan_out), jnp.float32, -lim, lim)
        return w, b

    W_ent, b_ent = linear_init(ks[2], D, D)        # linear_entity
    W_rel, b_rel = linear_init(ks[3], D, D)        # linear_relation
    W_q, b_q = linear_init(ks[4], SD, D)           # linear_question
    W1, b1 = linear_init(ks[5], 4 * D, D)          # score_cat_layer_one (tango: 4*dim)
    W2, b2 = linear_init(ks[6], D, 1)              # score_cat_layer_two

    # transposed weights for the lane-dense (edges-on-lanes) kernel layout
    wp = dict(WeT=W_ent.T, beT=b_ent.T, WrT=W_rel.T, brT=b_rel.T,
              W1abcT=W1[:3 * D, :].T, W2T=W2.T, b2=b2)

    # per-question inputs
    heads = jax.random.randint(ks[7], (B,), 0, NE)
    times = jax.random.randint(ks[8], (B,), 0, NT)
    answers = jax.random.randint(ks[9], (B,), 0, NE)

    # synthetic graph_origin[t][h] edges: (rel1, tail1, rel2, tail2, mask2)
    repea_num = [130, 90]
    E = sum(repea_num)
    E_pad = ((E + TE - 1) // TE) * TE
    rels_one = jax.random.randint(ks[10], (E,), 0, NR)
    rels_two = jax.random.randint(ks[11], (E,), 0, NR)
    tails_one = jax.random.randint(ks[12], (E,), 0, NE)
    tails_two = jax.random.randint(ks[13], (E,), 0, NE)
    masks_two = jax.random.bernoulli(ks[14], 0.7, (E,)).astype(jnp.float32)

    edge_batch = jnp.repeat(jnp.arange(B), jnp.array(repea_num),
                            total_repeat_length=E)
    times_rep = times[edge_batch]

    # embedding gathers + repeat_interleave (glue)
    head_raw = tkg_emb[times, heads][edge_batch]         # (E, D)
    t1_raw = tkg_emb[times_rep, tails_one]               # (E, D)
    t2_raw = tkg_emb[times_rep, tails_two]               # (E, D)
    r1_raw = tkg_emb[0, rels_one + NE]                   # (E, D)  (offset 20575 in module)
    r2_raw = tkg_emb[0, rels_two + NE]                   # (E, D)

    # ---- hoisted per-question work (plain JAX, B x SD tiny) ----
    q_proj = q_feat @ W_q + b_q                          # linear_question, once per question
    q_term = q_proj @ W1[3 * D:4 * D, :] + b1            # question slice of hidden layer + b1
    q_term_e = q_term[edge_batch]                        # (E, D) per-edge gather

    def pad_rows(x, value=0):
        pad = E_pad - x.shape[0]
        return jnp.pad(x, ((0, pad),) + ((0, 0),) * (x.ndim - 1),
                       constant_values=value)

    # transposed (D, E_pad) feature streams, edges on lanes
    head_T = pad_rows(head_raw).T
    t1_T = pad_rows(t1_raw).T
    t2_T = pad_rows(t2_raw).T
    r1_T = pad_rows(r1_raw).T
    r2_T = pad_rows(r2_raw).T
    qt_T = pad_rows(q_term_e).T
    m2_row = pad_rows(masks_two[:, None]).T              # (1, E_pad)
    # pad values chosen so padded edges are excluded in the scatter kernel:
    # tails -> NE (no entity column), batch id -> B (no real batch)
    tails1_col = pad_rows(tails_one[:, None].astype(jnp.int32), value=NE)
    tails2_col = pad_rows(tails_two[:, None].astype(jnp.int32), value=NE)
    eb_col = pad_rows(edge_batch[:, None].astype(jnp.int32), value=B)

    # ---- Pallas kernels ----
    s1_row, s2_row = edge_scores(head_T, t1_T, t2_T, r1_T, r2_T, qt_T, m2_row, wp)
    scores = propagate_scores(s1_row, s2_row, tails1_col, tails2_col, eb_col)
    loss = ce_loss_sum(scores, answers[:, None].astype(jnp.int32))
    scores = jax.block_until_ready(scores)
    loss = jax.block_until_ready(loss)

    # ---- pure-JAX reference ----
    def reference():
        lin = lambda x, w, b: jnp.dot(x, w, precision="highest") + b
        s = lin(head_raw, W_ent, b_ent)
        n1 = lin(t1_raw, W_ent, b_ent)
        n2 = lin(t2_raw, W_ent, b_ent)
        r1 = lin(r1_raw, W_rel, b_rel)
        r2 = lin(r2_raw, W_rel, b_rel)
        q = lin(q_feat, W_q, b_q)[edge_batch]

        def net(a, b_, c, d):
            cat = jnp.concatenate([a, b_, c, d], axis=-1)
            h = jnp.maximum(jnp.dot(cat, W1, precision="highest") + b1, 0.0)
            return jnp.dot(h, W2, precision="highest") + b2

        sc1 = net(s, r1, n1, q)[:, 0]
        sc2 = (net(n1, r2, n2, q) * masks_two[:, None])[:, 0]

        def seg_mean(v, comb):
            sums = jax.ops.segment_sum(v, comb, num_segments=B * NE)
            cnts = jax.ops.segment_sum(jnp.ones_like(v), comb, num_segments=B * NE)
            return (sums / jnp.maximum(cnts, 1.0)).reshape(B, NE)

        mean1 = seg_mean(sc1, edge_batch * NE + tails_one)
        mean2 = seg_mean(sc2, edge_batch * NE + tails_two)
        out_one = GAMMA * 1.0 + mean1
        final = GAMMA * out_one + mean2
        final = jnp.where(final == 0.0, -99999.0, final)
        lse = jax.scipy.special.logsumexp(final, axis=1)
        ref_loss = jnp.sum(lse - final[jnp.arange(B), answers])
        return final, ref_loss

    ref_scores, ref_loss = reference()
    np.testing.assert_allclose(np.asarray(scores), np.asarray(ref_scores),
                               rtol=1e-2, atol=1e-2)
    np.testing.assert_allclose(float(loss[0, 0]), float(ref_loss),
                               rtol=1e-2, atol=1e-2)

    print("KERNEL_OK")
</pallas_src>

<mosaic_0001>
module attributes {stable_mosaic.version = 11 : i64} {
  func.func @_edge_score_kernel(%arg0: i32, %arg1: memref<32x128xf32, #tpu.memory_space<vmem>>, %arg2: memref<32x128xf32, #tpu.memory_space<vmem>>, %arg3: memref<32x128xf32, #tpu.memory_space<vmem>>, %arg4: memref<32x128xf32, #tpu.memory_space<vmem>>, %arg5: memref<32x128xf32, #tpu.memory_space<vmem>>, %arg6: memref<32x128xf32, #tpu.memory_space<vmem>>, %arg7: memref<1x128xf32, #tpu.memory_space<vmem>>, %arg8: memref<32x32xf32, #tpu.memory_space<vmem>>, %arg9: memref<32x1xf32, #tpu.memory_space<vmem>>, %arg10: memref<32x32xf32, #tpu.memory_space<vmem>>, %arg11: memref<32x1xf32, #tpu.memory_space<vmem>>, %arg12: memref<32x96xf32, #tpu.memory_space<vmem>>, %arg13: memref<1x32xf32, #tpu.memory_space<vmem>>, %arg14: memref<1x1xf32, #tpu.memory_space<vmem>>, %arg15: memref<1x128xf32, #tpu.memory_space<vmem>>, %arg16: memref<1x128xf32, #tpu.memory_space<vmem>>) attributes {dimension_semantics = [#tpu.dimension_semantics<parallel>], iteration_bounds = array<i64: 2>, scalar_prefetch = 0 : i64, scratch_operands = 0 : i64, tpu.core_type = #tpu.core_type<tc>, window_params = [{transform_indices = @transform_0, window_bounds = array<i64: 32, 128>}, {transform_indices = @transform_1, window_bounds = array<i64: 32, 128>}, {transform_indices = @transform_2, window_bounds = array<i64: 32, 128>}, {transform_indices = @transform_3, window_bounds = array<i64: 32, 128>}, {transform_indices = @transform_4, window_bounds = array<i64: 32, 128>}, {transform_indices = @transform_5, window_bounds = array<i64: 32, 128>}, {transform_indices = @transform_6, window_bounds = array<i64: 1, 128>}, {pipeline_mode = #tpu.pipeline_mode<synchronous>, transform_indices = @transform_7, window_bounds = array<i64: 32, 32>}, {pipeline_mode = #tpu.pipeline_mode<synchronous>, transform_indices = @transform_8, window_bounds = array<i64: 32, 1>}, {pipeline_mode = #tpu.pipeline_mode<synchronous>, transform_indices = @transform_9, window_bounds = array<i64: 32, 32>}, {pipeline_mode = #tpu.pipeline_mode<synchronous>, transform_indices = @transform_10, window_bounds = array<i64: 32, 1>}, {pipeline_mode = #tpu.pipeline_mode<synchronous>, transform_indices = @transform_11, window_bounds = array<i64: 32, 96>}, {pipeline_mode = #tpu.pipeline_mode<synchronous>, transform_indices = @transform_12, window_bounds = array<i64: 1, 32>}, {pipeline_mode = #tpu.pipeline_mode<synchronous>, transform_indices = @transform_13, window_bounds = array<i64: 1, 1>}, {transform_indices = @transform_14, window_bounds = array<i64: 1, 128>}, {transform_indices = @transform_15, window_bounds = array<i64: 1, 128>}]} {
    %c0 = arith.constant 0 : index
    %c0_0 = arith.constant 0 : index
    %0 = vector.load %arg8[%c0, %c0_0] : memref<32x32xf32, #tpu.memory_space<vmem>>, vector<32x32xf32>
    %c0_1 = arith.constant 0 : index
    %c0_2 = arith.constant 0 : index
    %1 = vector.load %arg1[%c0_1, %c0_2] : memref<32x128xf32, #tpu.memory_space<vmem>>, vector<32x128xf32>
    %cst = arith.constant dense<0.000000e+00> : vector<32x128xf32>
    %2 = tpu.matmul %0, %1, %cst {dimension_numbers = #tpu.dot_dimension_numbers<[1], [0], [0], [1], [0, 0, 1, 1], [], []>} : vector<32x32xf32>, vector<32x128xf32>, vector<32x128xf32> -> vector<32x128xf32>
    %c0_3 = arith.constant 0 : index
    %c0_4 = arith.constant 0 : index
    %3 = vector.load %arg9[%c0_3, %c0_4] : memref<32x1xf32, #tpu.memory_space<vmem>>, vector<32x1xf32>
    %4 = vector.broadcast %3 : vector<32x1xf32> to vector<32x128xf32>
    %5 = arith.addf %2, %4 : vector<32x128xf32>
    %c0_5 = arith.constant 0 : index
    %c0_6 = arith.constant 0 : index
    %6 = vector.load %arg8[%c0_5, %c0_6] : memref<32x32xf32, #tpu.memory_space<vmem>>, vector<32x32xf32>
    %c0_7 = arith.constant 0 : index
    %c0_8 = arith.constant 0 : index
    %7 = vector.load %arg2[%c0_7, %c0_8] : memref<32x128xf32, #tpu.memory_space<vmem>>, vector<32x128xf32>
    %cst_9 = arith.constant dense<0.000000e+00> : vector<32x128xf32>
    %8 = tpu.matmul %6, %7, %cst_9 {dimension_numbers = #tpu.dot_dimension_numbers<[1], [0], [0], [1], [0, 0, 1, 1], [], []>} : vector<32x32xf32>, vector<32x128xf32>, vector<32x128xf32> -> vector<32x128xf32>
    %c0_10 = arith.constant 0 : index
    %c0_11 = arith.constant 0 : index
    %9 = vector.load %arg9[%c0_10, %c0_11] : memref<32x1xf32, #tpu.memory_space<vmem>>, vector<32x1xf32>
    %10 = vector.broadcast %9 : vector<32x1xf32> to vector<32x128xf32>
    %11 = arith.addf %8, %10 : vector<32x128xf32>
    %c0_12 = arith.constant 0 : index
    %c0_13 = arith.constant 0 : index
    %12 = vector.load %arg8[%c0_12, %c0_13] : memref<32x32xf32, #tpu.memory_space<vmem>>, vector<32x32xf32>
    %c0_14 = arith.constant 0 : index
    %c0_15 = arith.constant 0 : index
    %13 = vector.load %arg3[%c0_14, %c0_15] : memref<32x128xf32, #tpu.memory_space<vmem>>, vector<32x128xf32>
    %cst_16 = arith.constant dense<0.000000e+00> : vector<32x128xf32>
    %14 = tpu.matmul %12, %13, %cst_16 {dimension_numbers = #tpu.dot_dimension_numbers<[1], [0], [0], [1], [0, 0, 1, 1], [], []>} : vector<32x32xf32>, vector<32x128xf32>, vector<32x128xf32> -> vector<32x128xf32>
    %c0_17 = arith.constant 0 : index
    %c0_18 = arith.constant 0 : index
    %15 = vector.load %arg9[%c0_17, %c0_18] : memref<32x1xf32, #tpu.memory_space<vmem>>, vector<32x1xf32>
    %16 = vector.broadcast %15 : vector<32x1xf32> to vector<32x128xf32>
    %17 = arith.addf %14, %16 : vector<32x128xf32>
    %c0_19 = arith.constant 0 : index
    %c0_20 = arith.constant 0 : index
    %18 = vector.load %arg10[%c0_19, %c0_20] : memref<32x32xf32, #tpu.memory_space<vmem>>, vector<32x32xf32>
    %c0_21 = arith.constant 0 : index
    %c0_22 = arith.constant 0 : index
    %19 = vector.load %arg4[%c0_21, %c0_22] : memref<32x128xf32, #tpu.memory_space<vmem>>, vector<32x128xf32>
    %cst_23 = arith.constant dense<0.000000e+00> : vector<32x128xf32>
    %20 = tpu.matmul %18, %19, %cst_23 {dimension_numbers = #tpu.dot_dimension_numbers<[1], [0], [0], [1], [0, 0, 1, 1], [], []>} : vector<32x32xf32>, vector<32x128xf32>, vector<32x128xf32> -> vector<32x128xf32>
    %c0_24 = arith.constant 0 : index
    %c0_25 = arith.constant 0 : index
    %21 = vector.load %arg11[%c0_24, %c0_25] : memref<32x1xf32, #tpu.memory_space<vmem>>, vector<32x1xf32>
    %22 = vector.broadcast %21 : vector<32x1xf32> to vector<32x128xf32>
    %23 = arith.addf %20, %22 : vector<32x128xf32>
    %c0_26 = arith.constant 0 : index
    %c0_27 = arith.constant 0 : index
    %24 = vector.load %arg10[%c0_26, %c0_27] : memref<32x32xf32, #tpu.memory_space<vmem>>, vector<32x32xf32>
    %c0_28 = arith.constant 0 : index
    %c0_29 = arith.constant 0 : index
    %25 = vector.load %arg5[%c0_28, %c0_29] : memref<32x128xf32, #tpu.memory_space<vmem>>, vector<32x128xf32>
    %cst_30 = arith.constant dense<0.000000e+00> : vector<32x128xf32>
    %26 = tpu.matmul %24, %25, %cst_30 {dimension_numbers = #tpu.dot_dimension_numbers<[1], [0], [0], [1], [0, 0, 1, 1], [], []>} : vector<32x32xf32>, vector<32x128xf32>, vector<32x128xf32> -> vector<32x128xf32>
    %c0_31 = arith.constant 0 : index
    %c0_32 = arith.constant 0 : index
    %27 = vector.load %arg11[%c0_31, %c0_32] : memref<32x1xf32, #tpu.memory_space<vmem>>, vector<32x1xf32>
    %28 = vector.broadcast %27 : vector<32x1xf32> to vector<32x128xf32>
    %29 = arith.addf %26, %28 : vector<32x128xf32>
    %c0_33 = arith.constant 0 : index
    %c0_34 = arith.constant 0 : index
    %30 = vector.load %arg6[%c0_33, %c0_34] : memref<32x128xf32, #tpu.memory_space<vmem>>, vector<32x128xf32>
    %c0_35 = arith.constant 0 : index
    %c0_36 = arith.constant 0 : index
    %31 = vector.load %arg12[%c0_35, %c0_36] : memref<32x96xf32, #tpu.memory_space<vmem>>, vector<32x96xf32>
    %32 = tpu.concatenate %5, %23, %11 in 0 : vector<32x128xf32>, vector<32x128xf32>, vector<32x128xf32> -> vector<96x128xf32>
    %cst_37 = arith.constant dense<0.000000e+00> : vector<32x128xf32>
    %33 = tpu.matmul %31, %32, %cst_37 {dimension_numbers = #tpu.dot_dimension_numbers<[1], [0], [0], [1], [0, 0, 1, 1], [], []>} : vector<32x96xf32>, vector<96x128xf32>, vector<32x128xf32> -> vector<32x128xf32>
    %34 = arith.addf %33, %30 : vector<32x128xf32>
    %cst_38 = arith.constant 0.000000e+00 : f32
    %35 = vector.broadcast %cst_38 : f32 to vector<32x128xf32>
    %36 = arith.maximumf %34, %35 : vector<32x128xf32>
    %c0_39 = arith.constant 0 : index
    %c0_40 = arith.constant 0 : index
    %37 = vector.load %arg13[%c0_39, %c0_40] : memref<1x32xf32, #tpu.memory_space<vmem>>, vector<1x32xf32>
    %cst_41 = arith.constant dense<0.000000e+00> : vector<1x128xf32>
    %38 = tpu.matmul %37, %36, %cst_41 {dimension_numbers = #tpu.dot_dimension_numbers<[1], [0], [0], [1], [0, 0, 1, 1], [], []>} : vector<1x32xf32>, vector<32x128xf32>, vector<1x128xf32> -> vector<1x128xf32>
    %c0_42 = arith.constant 0 : index
    %c0_43 = arith.constant 0 : index
    %39 = vector.load %arg14[%c0_42, %c0_43] : memref<1x1xf32, #tpu.memory_space<vmem>>, vector<1x1xf32>
    %40 = vector.broadcast %39 : vector<1x1xf32> to vector<1x128xf32>
    %41 = arith.addf %38, %40 : vector<1x128xf32>
    %c0_44 = arith.constant 0 : index
    %c0_45 = arith.constant 0 : index
    %42 = vector.load %arg15[%c0_44, %c0_45] : memref<1x128xf32, #tpu.memory_space<vmem>>, vector<1x128xf32>
    tpu.vector_store %arg15[%c0_44, %c0_45], %41 {strides = array<i32>} : memref<1x128xf32, #tpu.memory_space<vmem>>, vector<1x128xf32>,
    %c0_46 = arith.constant 0 : index
    %c0_47 = arith.constant 0 : index
    %43 = vector.load %arg12[%c0_46, %c0_47] : memref<32x96xf32, #tpu.memory_space<vmem>>, vector<32x96xf32>
    %44 = tpu.concatenate %11, %29, %17 in 0 : vector<32x128xf32>, vector<32x128xf32>, vector<32x128xf32> -> vector<96x128xf32>
    %cst_48 = arith.constant dense<0.000000e+00> : vector<32x128xf32>
    %45 = tpu.matmul %43, %44, %cst_48 {dimension_numbers = #tpu.dot_dimension_numbers<[1], [0], [0], [1], [0, 0, 1, 1], [], []>} : vector<32x96xf32>, vector<96x128xf32>, vector<32x128xf32> -> vector<32x128xf32>
    %46 = arith.addf %45, %30 : vector<32x128xf32>
    %cst_49 = arith.constant 0.000000e+00 : f32
    %47 = vector.broadcast %cst_49 : f32 to vector<32x128xf32>
    %48 = arith.maximumf %46, %47 : vector<32x128xf32>
    %c0_50 = arith.constant 0 : index
    %c0_51 = arith.constant 0 : index
    %49 = vector.load %arg13[%c0_50, %c0_51] : memref<1x32xf32, #tpu.memory_space<vmem>>, vector<1x32xf32>
    %cst_52 = arith.constant dense<0.000000e+00> : vector<1x128xf32>
    %50 = tpu.matmul %49, %48, %cst_52 {dimension_numbers = #tpu.dot_dimension_numbers<[1], [0], [0], [1], [0, 0, 1, 1], [], []>} : vector<1x32xf32>, vector<32x128xf32>, vector<1x128xf32> -> vector<1x128xf32>
    %c0_53 = arith.constant 0 : index
    %c0_54 = arith.constant 0 : index
    %51 = vector.load %arg14[%c0_53, %c0_54] : memref<1x1xf32, #tpu.memory_space<vmem>>, vector<1x1xf32>
    %52 = vector.broadcast %51 : vector<1x1xf32> to vector<1x128xf32>
    %53 = arith.addf %50, %52 : vector<1x128xf32>
    %c0_55 = arith.constant 0 : index
    %c0_56 = arith.constant 0 : index
    %54 = vector.load %arg7[%c0_55, %c0_56] : memref<1x128xf32, #tpu.memory_space<vmem>>, vector<1x128xf32>
    %55 = arith.mulf %53, %54 : vector<1x128xf32>
    %c0_57 = arith.constant 0 : index
    %c0_58 = arith.constant 0 : index
    %56 = vector.load %arg16[%c0_57, %c0_58] : memref<1x128xf32, #tpu.memory_space<vmem>>, vector<1x128xf32>
    tpu.vector_store %arg16[%c0_57, %c0_58], %55 {strides = array<i32>} : memref<1x128xf32, #tpu.memory_space<vmem>>, vector<1x128xf32>,
    return
  }
  func.func @transform_0(%arg0: i32) -> (i32, i32) {
    %c0_i32 = arith.constant 0 : i32
    %c0_i32_0 = arith.constant 0 : i32
    return %c0_i32, %arg0 : i32, i32
  }
  func.func @transform_1(%arg0: i32) -> (i32, i32) {
    %c0_i32 = arith.constant 0 : i32
    %c0_i32_0 = arith.constant 0 : i32
    return %c0_i32, %arg0 : i32, i32
  }
  func.func @transform_2(%arg0: i32) -> (i32, i32) {
    %c0_i32 = arith.constant 0 : i32
    %c0_i32_0 = arith.constant 0 : i32
    return %c0_i32, %arg0 : i32, i32
  }
  func.func @transform_3(%arg0: i32) -> (i32, i32) {
    %c0_i32 = arith.constant 0 : i32
    %c0_i32_0 = arith.constant 0 : i32
    return %c0_i32, %arg0 : i32, i32
  }
  func.func @transform_4(%arg0: i32) -> (i32, i32) {
    %c0_i32 = arith.constant 0 : i32
    %c0_i32_0 = arith.constant 0 : i32
    return %c0_i32, %arg0 : i32, i32
  }
  func.func @transform_5(%arg0: i32) -> (i32, i32) {
    %c0_i32 = arith.constant 0 : i32
    %c0_i32_0 = arith.constant 0 : i32
    return %c0_i32, %arg0 : i32, i32
  }
  func.func @transform_6(%arg0: i32) -> (i32, i32) {
    %c0_i32 = arith.constant 0 : i32
    %c0_i32_0 = arith.constant 0 : i32
    return %c0_i32, %arg0 : i32, i32
  }
  func.func @transform_7(%arg0: i32) -> (i32, i32) {
    %c0_i32 = arith.constant 0 : i32
    %c0_i32_0 = arith.constant 0 : i32
    %c0_i32_1 = arith.constant 0 : i32
    return %c0_i32, %c0_i32_0 : i32, i32
  }
  func.func @transform_8(%arg0: i32) -> (i32, i32) {
    %c0_i32 = arith.constant 0 : i32
    %c0_i32_0 = arith.constant 0 : i32
    %c0_i32_1 = arith.constant 0 : i32
    return %c0_i32, %c0_i32_0 : i32, i32
  }
  func.func @transform_9(%arg0: i32) -> (i32, i32) {
    %c0_i32 = arith.constant 0 : i32
    %c0_i32_0 = arith.constant 0 : i32
    %c0_i32_1 = arith.constant 0 : i32
    return %c0_i32, %c0_i32_0 : i32, i32
  }
  func.func @transform_10(%arg0: i32) -> (i32, i32) {
    %c0_i32 = arith.constant 0 : i32
    %c0_i32_0 = arith.constant 0 : i32
    %c0_i32_1 = arith.constant 0 : i32
    return %c0_i32, %c0_i32_0 : i32, i32
  }
  func.func @transform_11(%arg0: i32) -> (i32, i32) {
    %c0_i32 = arith.constant 0 : i32
    %c0_i32_0 = arith.constant 0 : i32
    %c0_i32_1 = arith.constant 0 : i32
    return %c0_i32, %c0_i32_0 : i32, i32
  }
  func.func @transform_12(%arg0: i32) -> (i32, i32) {
    %c0_i32 = arith.constant 0 : i32
    %c0_i32_0 = arith.constant 0 : i32
    %c0_i32_1 = arith.constant 0 : i32
    return %c0_i32, %c0_i32_0 : i32, i32
  }
  func.func @transform_13(%arg0: i32) -> (i32, i32) {
    %c0_i32 = arith.constant 0 : i32
    %c0_i32_0 = arith.constant 0 : i32
    %c0_i32_1 = arith.constant 0 : i32
    return %c0_i32, %c0_i32_0 : i32, i32
  }
  func.func @transform_14(%arg0: i32) -> (i32, i32) {
    %c0_i32 = arith.constant 0 : i32
    %c0_i32_0 = arith.constant 0 : i32
    return %c0_i32, %arg0 : i32, i32
  }
  func.func @transform_15(%arg0: i32) -> (i32, i32) {
    %c0_i32 = arith.constant 0 : i32
    %c0_i32_0 = arith.constant 0 : i32
    return %c0_i32, %arg0 : i32, i32
  }
}

</mosaic_0001>

<llo_original>
// kernel: tpu_custom_call.1
$region0: #{tpu_custom_call.1}
  #allocation0 [shape = 'u32[]', space=smem, size = 0x4, offset = 0x4, fixed_abs, tag = 'smem constant byte address 0x4 - core index']
  #allocation1 [shape = 'u32[72,128]{1,0:T(1,128)}', space=vmem, size = 0x9000, scoped, tag = 'internal scratch']
  #allocation2 [shape = 'f32[1,1]{1,0:T(1,128)S(1)}', space=vmem, size = 0x200, scoped, tag = 'scoped memory for tpu_custom_call.1']
  %s0 = inlined_call_operand.vmem [shape: f32[32,256], index: 0, kind: input, shape index: {}]
  %s1 = inlined_call_operand.hbm [shape: f32[32,256], index: 1, kind: input, shape index: {}]
  %s2 = inlined_call_operand.hbm [shape: f32[32,256], index: 2, kind: input, shape index: {}]
  %s3 = inlined_call_operand.hbm [shape: f32[32,256], index: 3, kind: input, shape index: {}]
  %s4 = inlined_call_operand.hbm [shape: f32[32,256], index: 4, kind: input, shape index: {}]
  %s5 = inlined_call_operand.hbm [shape: f32[32,256], index: 5, kind: input, shape index: {}]
  %s6 = inlined_call_operand.vmem [shape: f32[1,256], index: 6, kind: input, shape index: {}]
  %s7 = inlined_call_operand.hbm [shape: f32[32,32], index: 7, kind: input, shape index: {}]
  %s8 = inlined_call_operand.vmem [shape: f32[32,1], index: 8, kind: input, shape index: {}]
  %s9 = inlined_call_operand.hbm [shape: f32[32,32], index: 9, kind: input, shape index: {}]
  %s10 = inlined_call_operand.vmem [shape: f32[32,1], index: 10, kind: input, shape index: {}]
  %s11 = inlined_call_operand.hbm [shape: f32[32,96], index: 11, kind: input, shape index: {}]
  %s12 = inlined_call_operand.vmem [shape: f32[1,32], index: 12, kind: input, shape index: {}]
  %s13 = inlined_call_operand.<no memory space> [shape: f32[1,1], index: 13, kind: input, shape index: {}]
  %s14 = inlined_call_operand.hbm [shape: f32[1,256], index: 14, kind: output, shape index: {0}]
  %s15 = inlined_call_operand.hbm [shape: f32[1,256], index: 15, kind: output, shape index: {1}]
  %16 = xla_tuple %s14, %s15
  %s17 = sld [smem:[#allocation0]]
  $region167: #{tpu_custom_call.1} parent=0
    _
  %s19 = ssub.s32 1, %s17
  %s20 = scalar_select 0, %s19, %s17
  %v21 = vstv %s13
  %22 = vst [vmem:[#allocation2] sm:$0x1] %v21
  $region1: #{tpu_custom_call.1} parent=0
    #allocation3 [shape = 'u8[32768]{0}', space=vmem, size = 0x8000, scoped, tag = 'input window, operand 0']
    #allocation4 [shape = 'u8[32768]{0}', space=vmem, size = 0x8000, scoped, tag = 'input window, operand 1']
    #allocation5 [shape = 's32[2]{0}', space=sflag, size = 0x8, scoped, tag = 'scoped memory for tpu_custom_call.1']
    #allocation6 [shape = 's32[2]{0}', space=sflag, size = 0x8, scoped, tag = 'scoped memory for tpu_custom_call.1']
    #allocation7 [shape = 'u8[32768]{0}', space=vmem, size = 0x8000, scoped, tag = 'input window, operand 2']
    #allocation8 [shape = 's32[2]{0}', space=sflag, size = 0x8, scoped, tag = 'scoped memory for tpu_custom_call.1']
    #allocation9 [shape = 'u8[32768]{0}', space=vmem, size = 0x8000, scoped, tag = 'input window, operand 3']
    #allocation10 [shape = 'u8[32768]{0}', space=vmem, size = 0x8000, scoped, tag = 'input window, operand 4']
    #allocation11 [shape = 's32[2]{0}', space=sflag, size = 0x8, scoped, tag = 'scoped memory for tpu_custom_call.1']
    #allocation12 [shape = 'u8[32768]{0}', space=vmem, size = 0x8000, scoped, tag = 'input window, operand 5']
    #allocation13 [shape = 'u8[16384]{0}', space=vmem, size = 0x4000, scoped, tag = 'input window, operand 7, single buffered']
    #allocation14 [shape = 's32[1]{0}', space=sflag, size = 0x4, scoped, tag = 'scoped memory for tpu_custom_call.1']
    #allocation15 [shape = 'u8[16384]{0}', space=vmem, size = 0x4000, scoped, tag = 'input window, operand 9, single buffered']
    #allocation16 [shape = 'u8[16384]{0}', space=vmem, size = 0x4000, scoped, tag = 'input window, operand 11, single buffered']
    #allocation17 [shape = 's32[1]{0}', space=sflag, size = 0x4, scoped, tag = 'scoped memory for tpu_custom_call.1']
    #allocation18 [shape = 'u8[1024]{0}', space=vmem, size = 0x400, scoped, tag = 'output window, operand 0']
    #allocation19 [shape = 'u8[1024]{0}', space=vmem, size = 0x400, scoped, tag = 'output window, operand 1']
    #allocation20 [shape = 's32[2]{0}', space=sflag, size = 0x8, scoped, tag = 'scoped memory for tpu_custom_call.1']
    %23 = vsyncpa [#allocation5], 0
    %s24 = scalar_lea.sflag [#allocation5], 1
    %25 = vsyncpa %s24, 0
    %26 = vsyncpa [#allocation8], 0
    %s27 = scalar_lea.sflag [#allocation8], 1
    %28 = vsyncpa %s27, 0
    %29 = vsyncpa [#allocation11], 0
    %s30 = scalar_lea.sflag [#allocation11], 1
    %31 = vsyncpa %s30, 0
    %32 = vsyncpa [#allocation14], 0
    %33 = vsyncpa [#allocation17], 0
    %34 = vsyncpa [#allocation6], 0
    %s35 = scalar_lea.sflag [#allocation6], 1
    %36 = vsyncpa %s35, 0
    %37 = vsyncpa [#allocation20], 0
    %s38 = scalar_lea.sflag [#allocation20], 1
    %39 = vsyncpa %s38, 0
    loop: start=0, step=1, limit=4
    $region2: #{tpu_custom_call.1} parent=1 // loop_pre_header
      _
    $region3: #{tpu_custom_call.1} parent=1 // loop_header
      %s41 = sphi 0, %s45
      %p42 = scmp.ge.s32.totalorder %s41, 4
      %s51 = sphi 0, %s53
      %s54 = sphi 0, %s51
      %s55 = sphi 0, %s54
      %s71 = sphi 0, %s55
      %s77 = sphi 0, %s79
      %s80 = sphi 0, %s77
      %s81 = sphi 0, %s80
      %s97 = sphi 0, %s81
      %s103 = sphi 0, %s105
      %s106 = sphi 0, %s103
      %s107 = sphi 0, %s106
      %s123 = sphi 0, %s107
      %s129 = sphi 0, %s131
      %s132 = sphi 0, %s129
      %s133 = sphi 0, %s132
      %s149 = sphi 0, %s133
      %s155 = sphi 0, %s157
      %s158 = sphi 0, %s155
      %s159 = sphi 0, %s158
      %s175 = sphi 0, %s159
      %s181 = sphi 0, %s183
      %s184 = sphi 0, %s181
      %s185 = sphi 0, %s184
      %s201 = sphi 0, %s185
      %s207 = sphi 0, %s209
      %s210 = sphi 0, %s207
      %s211 = sphi 0, %s210
      %s227 = sphi 0, %s211
      %s231 = sphi 0, %s231
      %s233 = sphi 0, %s231
      %s234 = sphi 0, %s233
      %s248 = sphi 0, %s234
      %s252 = sphi 0, %s252
      %s254 = sphi 0, %s252
      %s255 = sphi 0, %s254
      %s269 = sphi 0, %s255
      %s273 = sphi 0, %s273
      %s275 = sphi 0, %s273
      %s276 = sphi 0, %s275
      %s290 = sphi 0, %s276
      %s294 = sphi 0, %s294
      %s296 = sphi 0, %s294
      %s297 = sphi 0, %s296
      %s311 = sphi 0, %s297
      %s315 = sphi 0, %s315
      %s317 = sphi 0, %s315
      %s318 = sphi 0, %s317
      %s332 = sphi 0, %s318
      %s336 = sphi 0, %s336
      %s338 = sphi 0, %s336
      %s339 = sphi 0, %s338
      %s353 = sphi 0, %s339
      %s357 = sphi 0, %s357
      %s359 = sphi 0, %s357
      %s360 = sphi 0, %s359
      %s374 = sphi 0, %s360
      %s380 = sphi 0, %s382
      %s383 = sphi 0, %s380
      %s384 = sphi 0, %s383
      %s400 = sphi 0, %s384
      %s406 = sphi 0, %s408
      %s409 = sphi 0, %s406
      %s410 = sphi 0, %s409
      %s426 = sphi 0, %s410
    $region4: #{tpu_custom_call.1} parent=1 // loop_header_branch
      %44 = sbr.rel (%p42) target = $region8
    $region5: #{tpu_custom_call.1} parent=1 // loop_body
      %s46 = ssub.s32 %s41, 1
      %s47 = ssub.s32 %s41, 2
      %s48 = sadd.s32 %s41, 1
      %s49 = ssub.s32 %s41, %s48
      %p50 = scmp.eq.s32.totalorder %s49, 0
      %s52 = sadd.s32 %s51, 1
      %s53 = scalar_select %p50, %s51, %s52
      %p56 = pneg %p50
      %p57 = scmp.eq.s32.totalorder %s41, 1
      %p58 = por %p56, %p57
      %p59 = scmp.ne.s32.totalorder %s51, %s54
      %p60 = scmp.eq.s32.totalorder %s41, 0
      %p61 = por %p59, %p60
      %p62 = scmp.ne.s32.totalorder %s51, %s54
      %p63 = scmp.eq.s32.totalorder %s46, 1
      %p64 = por %p62, %p63
      %p65 = scmp.ne.s32.totalorder %s54, %s55
      %p66 = scmp.eq.s32.totalorder %s46, 0
      %p67 = por %p65, %p66
      %p68 = scmp.ne.s32.totalorder %s54, %s55
      %p69 = scmp.eq.s32.totalorder %s47, 1
      %p70 = por %p68, %p69
      %p72 = scmp.ne.s32.totalorder %s55, %s71
      %p73 = scmp.eq.s32.totalorder %s47, 0
      %p74 = por %p72, %p73
      %s75 = ssub.s32 %s41, %s48
      %p76 = scmp.eq.s32.totalorder %s75, 0
      %s78 = sadd.s32 %s77, 1
      %s79 = scalar_select %p76, %s77, %s78
      %p82 = pneg %p76
      %p83 = scmp.eq.s32.totalorder %s41, 1
      %p84 = por %p82, %p83
      %p85 = scmp.ne.s32.totalorder %s77, %s80
      %p86 = scmp.eq.s32.totalorder %s41, 0
      %p87 = por %p85, %p86
      %p88 = scmp.ne.s32.totalorder %s77, %s80
      %p89 = scmp.eq.s32.totalorder %s46, 1
      %p90 = por %p88, %p89
      %p91 = scmp.ne.s32.totalorder %s80, %s81
      %p92 = scmp.eq.s32.totalorder %s46, 0
      %p93 = por %p91, %p92
      %p94 = scmp.ne.s32.totalorder %s80, %s81
      %p95 = scmp.eq.s32.totalorder %s47, 1
      %p96 = por %p94, %p95
      %p98 = scmp.ne.s32.totalorder %s81, %s97
      %p99 = scmp.eq.s32.totalorder %s47, 0
      %p100 = por %p98, %p99
      %s101 = ssub.s32 %s41, %s48
      %p102 = scmp.eq.s32.totalorder %s101, 0
      %s104 = sadd.s32 %s103, 1
      %s105 = scalar_select %p102, %s103, %s104
      %p108 = pneg %p102
      %p109 = scmp.eq.s32.totalorder %s41, 1
      %p110 = por %p108, %p109
      %p111 = scmp.ne.s32.totalorder %s103, %s106
      %p112 = scmp.eq.s32.totalorder %s41, 0
      %p113 = por %p111, %p112
      %p114 = scmp.ne.s32.totalorder %s103, %s106
      %p115 = scmp.eq.s32.totalorder %s46, 1
      %p116 = por %p114, %p115
      %p117 = scmp.ne.s32.totalorder %s106, %s107
      %p118 = scmp.eq.s32.totalorder %s46, 0
      %p119 = por %p117, %p118
      %p120 = scmp.ne.s32.totalorder %s106, %s107
      %p121 = scmp.eq.s32.totalorder %s47, 1
      %p122 = por %p120, %p121
      %p124 = scmp.ne.s32.totalorder %s107, %s123
      %p125 = scmp.eq.s32.totalorder %s47, 0
      %p126 = por %p124, %p125
      %s127 = ssub.s32 %s41, %s48
      %p128 = scmp.eq.s32.totalorder %s127, 0
      %s130 = sadd.s32 %s129, 1
      %s131 = scalar_select %p128, %s129, %s130
      %p134 = pneg %p128
      %p135 = scmp.eq.s32.totalorder %s41, 1
      %p136 = por %p134, %p135
      %p137 = scmp.ne.s32.totalorder %s129, %s132
      %p138 = scmp.eq.s32.totalorder %s41, 0
      %p139 = por %p137, %p138
      %p140 = scmp.ne.s32.totalorder %s129, %s132
      %p141 = scmp.eq.s32.totalorder %s46, 1
      %p142 = por %p140, %p141
      %p143 = scmp.ne.s32.totalorder %s132, %s133
      %p144 = scmp.eq.s32.totalorder %s46, 0
      %p145 = por %p143, %p144
      %p146 = scmp.ne.s32.totalorder %s132, %s133
      %p147 = scmp.eq.s32.totalorder %s47, 1
      %p148 = por %p146, %p147
      %p150 = scmp.ne.s32.totalorder %s133, %s149
      %p151 = scmp.eq.s32.totalorder %s47, 0
      %p152 = por %p150, %p151
      %s153 = ssub.s32 %s41, %s48
      %p154 = scmp.eq.s32.totalorder %s153, 0
      %s156 = sadd.s32 %s155, 1
      %s157 = scalar_select %p154, %s155, %s156
      %p160 = pneg %p154
      %p161 = scmp.eq.s32.totalorder %s41, 1
      %p162 = por %p160, %p161
      %p163 = scmp.ne.s32.totalorder %s155, %s158
      %p164 = scmp.eq.s32.totalorder %s41, 0
      %p165 = por %p163, %p164
      %p166 = scmp.ne.s32.totalorder %s155, %s158
      %p167 = scmp.eq.s32.totalorder %s46, 1
      %p168 = por %p166, %p167
      %p169 = scmp.ne.s32.totalorder %s158, %s159
      %p170 = scmp.eq.s32.totalorder %s46, 0
      %p171 = por %p169, %p170
      %p172 = scmp.ne.s32.totalorder %s158, %s159
      %p173 = scmp.eq.s32.totalorder %s47, 1
      %p174 = por %p172, %p173
      %p176 = scmp.ne.s32.totalorder %s159, %s175
      %p177 = scmp.eq.s32.totalorder %s47, 0
      %p178 = por %p176, %p177
      %s179 = ssub.s32 %s41, %s48
      %p180 = scmp.eq.s32.totalorder %s179, 0
      %s182 = sadd.s32 %s181, 1
      %s183 = scalar_select %p180, %s181, %s182
      %p186 = pneg %p180
      %p187 = scmp.eq.s32.totalorder %s41, 1
      %p188 = por %p186, %p187
      %p189 = scmp.ne.s32.totalorder %s181, %s184
      %p190 = scmp.eq.s32.totalorder %s41, 0
      %p191 = por %p189, %p190
      %p192 = scmp.ne.s32.totalorder %s181, %s184
      %p193 = scmp.eq.s32.totalorder %s46, 1
      %p194 = por %p192, %p193
      %p195 = scmp.ne.s32.totalorder %s184, %s185
      %p196 = scmp.eq.s32.totalorder %s46, 0
      %p197 = por %p195, %p196
      %p198 = scmp.ne.s32.totalorder %s184, %s185
      %p199 = scmp.eq.s32.totalorder %s47, 1
      %p200 = por %p198, %p199
      %p202 = scmp.ne.s32.totalorder %s185, %s201
      %p203 = scmp.eq.s32.totalorder %s47, 0
      %p204 = por %p202, %p203
      %s205 = ssub.s32 %s41, %s48
      %p206 = scmp.eq.s32.totalorder %s205, 0
      %s208 = sadd.s32 %s207, 1
      %s209 = scalar_select %p206, %s207, %s208
      %p212 = pneg %p206
      %p213 = scmp.eq.s32.totalorder %s41, 1
      %p214 = por %p212, %p213
      %p215 = scmp.ne.s32.totalorder %s207, %s210
      %p216 = scmp.eq.s32.totalorder %s41, 0
      %p217 = por %p215, %p216
      %p218 = scmp.ne.s32.totalorder %s207, %s210
      %p219 = scmp.eq.s32.totalorder %s46, 1
      %p220 = por %p218, %p219
      %p221 = scmp.ne.s32.totalorder %s210, %s211
      %p222 = scmp.eq.s32.totalorder %s46, 0
      %p223 = por %p221, %p222
      %p224 = scmp.ne.s32.totalorder %s210, %s211
      %p225 = scmp.eq.s32.totalorder %s47, 1
      %p226 = por %p224, %p225
      %p228 = scmp.ne.s32.totalorder %s211, %s227
      %p229 = scmp.eq.s32.totalorder %s47, 0
      %p230 = por %p228, %p229
      %s232 = sadd.s32 %s231, 1
      %p235 = scmp.eq.s32.totalorder %s41, 1
      %p236 = scmp.ne.s32.totalorder %s231, %s233
      %p237 = scmp.eq.s32.totalorder %s41, 0
      %p238 = por %p236, %p237
      %p239 = scmp.ne.s32.totalorder %s231, %s233
      %p240 = scmp.eq.s32.totalorder %s46, 1
      %p241 = por %p239, %p240
      %p242 = scmp.ne.s32.totalorder %s233, %s234
      %p243 = scmp.eq.s32.totalorder %s46, 0
      %p244 = por %p242, %p243
      %p245 = scmp.ne.s32.totalorder %s233, %s234
      %p246 = scmp.eq.s32.totalorder %s47, 1
      %p247 = por %p245, %p246
      %p249 = scmp.ne.s32.totalorder %s234, %s248
      %p250 = scmp.eq.s32.totalorder %s47, 0
      %p251 = por %p249, %p250
      %s253 = sadd.s32 %s252, 1
      %p256 = scmp.eq.s32.totalorder %s41, 1
      %p257 = scmp.ne.s32.totalorder %s252, %s254
      %p258 = scmp.eq.s32.totalorder %s41, 0
      %p259 = por %p257, %p258
      %p260 = scmp.ne.s32.totalorder %s252, %s254
      %p261 = scmp.eq.s32.totalorder %s46, 1
      %p262 = por %p260, %p261
      %p263 = scmp.ne.s32.totalorder %s254, %s255
      %p264 = scmp.eq.s32.totalorder %s46, 0
      %p265 = por %p263, %p264
      %p266 = scmp.ne.s32.totalorder %s254, %s255
      %p267 = scmp.eq.s32.totalorder %s47, 1
      %p268 = por %p266, %p267
      %p270 = scmp.ne.s32.totalorder %s255, %s269
      %p271 = scmp.eq.s32.totalorder %s47, 0
      %p272 = por %p270, %p271
      %s274 = sadd.s32 %s273, 1
      %p277 = scmp.eq.s32.totalorder %s41, 1
      %p278 = scmp.ne.s32.totalorder %s273, %s275
      %p279 = scmp.eq.s32.totalorder %s41, 0
      %p280 = por %p278, %p279
      %p281 = scmp.ne.s32.totalorder %s273, %s275
      %p282 = scmp.eq.s32.totalorder %s46, 1
      %p283 = por %p281, %p282
      %p284 = scmp.ne.s32.totalorder %s275, %s276
      %p285 = scmp.eq.s32.totalorder %s46, 0
      %p286 = por %p284, %p285
      %p287 = scmp.ne.s32.totalorder %s275, %s276
      %p288 = scmp.eq.s32.totalorder %s47, 1
      %p289 = por %p287, %p288
      %p291 = scmp.ne.s32.totalorder %s276, %s290
      %p292 = scmp.eq.s32.totalorder %s47, 0
      %p293 = por %p291, %p292
      %s295 = sadd.s32 %s294, 1
      %p298 = scmp.eq.s32.totalorder %s41, 1
      %p299 = scmp.ne.s32.totalorder %s294, %s296
      %p300 = scmp.eq.s32.totalorder %s41, 0
      %p301 = por %p299, %p300
      %p302 = scmp.ne.s32.totalorder %s294, %s296
      %p303 = scmp.eq.s32.totalorder %s46, 1
      %p304 = por %p302, %p303
      %p305 = scmp.ne.s32.totalorder %s296, %s297
      %p306 = scmp.eq.s32.totalorder %s46, 0
      %p307 = por %p305, %p306
      %p308 = scmp.ne.s32.totalorder %s296, %s297
      %p309 = scmp.eq.s32.totalorder %s47, 1
      %p310 = por %p308, %p309
      %p312 = scmp.ne.s32.totalorder %s297, %s311
      %p313 = scmp.eq.s32.totalorder %s47, 0
      %p314 = por %p312, %p313
      %s316 = sadd.s32 %s315, 1
      %p319 = scmp.eq.s32.totalorder %s41, 1
      %p320 = scmp.ne.s32.totalorder %s315, %s317
      %p321 = scmp.eq.s32.totalorder %s41, 0
      %p322 = por %p320, %p321
      %p323 = scmp.ne.s32.totalorder %s315, %s317
      %p324 = scmp.eq.s32.totalorder %s46, 1
      %p325 = por %p323, %p324
      %p326 = scmp.ne.s32.totalorder %s317, %s318
      %p327 = scmp.eq.s32.totalorder %s46, 0
      %p328 = por %p326, %p327
      %p329 = scmp.ne.s32.totalorder %s317, %s318
      %p330 = scmp.eq.s32.totalorder %s47, 1
      %p331 = por %p329, %p330
      %p333 = scmp.ne.s32.totalorder %s318, %s332
      %p334 = scmp.eq.s32.totalorder %s47, 0
      %p335 = por %p333, %p334
      %s337 = sadd.s32 %s336, 1
      %p340 = scmp.eq.s32.totalorder %s41, 1
      %p341 = scmp.ne.s32.totalorder %s336, %s338
      %p342 = scmp.eq.s32.totalorder %s41, 0
      %p343 = por %p341, %p342
      %p344 = scmp.ne.s32.totalorder %s336, %s338
      %p345 = scmp.eq.s32.totalorder %s46, 1
      %p346 = por %p344, %p345
      %p347 = scmp.ne.s32.totalorder %s338, %s339
      %p348 = scmp.eq.s32.totalorder %s46, 0
      %p349 = por %p347, %p348
      %p350 = scmp.ne.s32.totalorder %s338, %s339
      %p351 = scmp.eq.s32.totalorder %s47, 1
      %p352 = por %p350, %p351
      %p354 = scmp.ne.s32.totalorder %s339, %s353
      %p355 = scmp.eq.s32.totalorder %s47, 0
      %p356 = por %p354, %p355
      %s358 = sadd.s32 %s357, 1
      %p361 = scmp.eq.s32.totalorder %s41, 1
      %p362 = scmp.ne.s32.totalorder %s357, %s359
      %p363 = scmp.eq.s32.totalorder %s41, 0
      %p364 = por %p362, %p363
      %p365 = scmp.ne.s32.totalorder %s357, %s359
      %p366 = scmp.eq.s32.totalorder %s46, 1
      %p367 = por %p365, %p366
      %p368 = scmp.ne.s32.totalorder %s359, %s360
      %p369 = scmp.eq.s32.totalorder %s46, 0
      %p370 = por %p368, %p369
      %p371 = scmp.ne.s32.totalorder %s359, %s360
      %p372 = scmp.eq.s32.totalorder %s47, 1
      %p373 = por %p371, %p372
      %p375 = scmp.ne.s32.totalorder %s360, %s374
      %p376 = scmp.eq.s32.totalorder %s47, 0
      %p377 = por %p375, %p376
      %s378 = ssub.s32 %s41, %s48
      %p379 = scmp.eq.s32.totalorder %s378, 0
      %s381 = sadd.s32 %s380, 1
      %s382 = scalar_select %p379, %s380, %s381
      %p385 = pneg %p379
      %p386 = scmp.eq.s32.totalorder %s41, 1
      %p387 = por %p385, %p386
      %p388 = scmp.ne.s32.totalorder %s380, %s383
      %p389 = scmp.eq.s32.totalorder %s41, 0
      %p390 = por %p388, %p389
      %p391 = scmp.ne.s32.totalorder %s380, %s383
      %p392 = scmp.eq.s32.totalorder %s46, 1
      %p393 = por %p391, %p392
      %p394 = scmp.ne.s32.totalorder %s383, %s384
      %p395 = scmp.eq.s32.totalorder %s46, 0
      %p396 = por %p394, %p395
      %p397 = scmp.ne.s32.totalorder %s383, %s384
      %p398 = scmp.eq.s32.totalorder %s47, 1
      %p399 = por %p397, %p398
      %p401 = scmp.ne.s32.totalorder %s384, %s400
      %p402 = scmp.eq.s32.totalorder %s47, 0
      %p403 = por %p401, %p402
      %s404 = ssub.s32 %s41, %s48
      %p405 = scmp.eq.s32.totalorder %s404, 0
      %s407 = sadd.s32 %s406, 1
      %s408 = scalar_select %p405, %s406, %s407
      %p411 = pneg %p405
      %p412 = scmp.eq.s32.totalorder %s41, 1
      %p413 = por %p411, %p412
      %p414 = scmp.ne.s32.totalorder %s406, %s409
      %p415 = scmp.eq.s32.totalorder %s41, 0
      %p416 = por %p414, %p415
      %p417 = scmp.ne.s32.totalorder %s406, %s409
      %p418 = scmp.eq.s32.totalorder %s46, 1
      %p419 = por %p417, %p418
      %p420 = scmp.ne.s32.totalorder %s409, %s410
      %p421 = scmp.eq.s32.totalorder %s46, 0
      %p422 = por %p420, %p421
      %p423 = scmp.ne.s32.totalorder %s409, %s410
      %p424 = scmp.eq.s32.totalorder %s47, 1
      %p425 = por %p423, %p424
      %p427 = scmp.ne.s32.totalorder %s410, %s426
      %p428 = scmp.eq.s32.totalorder %s47, 0
      %p429 = por %p427, %p428
      %p430 = scmp.le.s32.totalorder 1, %s41
      %p431 = scmp.lt.s32.totalorder %s41, 3
      %p432 = pnand %p430, %p431
      %p433 = pneg %p432
      // Predicated region
      $region9: #{tpu_custom_call.1} parent=5 // pred_check
        _
      $region10: #{tpu_custom_call.1} parent=5 // pred_check_branch
        %435 = sbr.rel (%p432) target = $region12
      $region11: #{tpu_custom_call.1} parent=5 // pred_region
        %s436 = ssub.s32 %s41, 1
        // Predicated region
        $region13: #{tpu_custom_call.1} parent=11 // pred_check
          %p437 = pneg %p244
        $region14: #{tpu_custom_call.1} parent=11 // pred_check_branch
          %439 = sbr.rel (%p437) target = $region16
        $region15: #{tpu_custom_call.1} parent=11 // pred_region
          %441 = vsyncadd [#allocation14], 0
          %s442 = sshll.u32 %s7, 4
          %s443 = int_to_ptr.hbm [resolvable:$true] %s442
          %s444 = sshll.u32 [#allocation13], 4
          %s445 = int_to_ptr.vmem [resolvable:$true] %s444
          %450 = dma.hbm_to_vmem [thread:$0]  %s443, 512, %s445, [#allocation14], 128, 128, 8
        $region16: #{tpu_custom_call.1} parent=11 // pred_fallthru
          _
        // Predicated region
        $region17: #{tpu_custom_call.1} parent=11 // pred_check
          %p451 = pneg %p265
        $region18: #{tpu_custom_call.1} parent=11 // pred_check_branch
          %453 = sbr.rel (%p451) target = $region20
        $region19: #{tpu_custom_call.1} parent=11 // pred_region
          _
        $region20: #{tpu_custom_call.1} parent=11 // pred_fallthru
          _
        // Predicated region
        $region21: #{tpu_custom_call.1} parent=11 // pred_check
          %p454 = pneg %p286
        $region22: #{tpu_custom_call.1} parent=11 // pred_check_branch
          %456 = sbr.rel (%p454) target = $region24
        $region23: #{tpu_custom_call.1} parent=11 // pred_region
          %458 = vsyncadd [#allocation14], 0
          %s459 = sshll.u32 %s9, 4
          %s460 = int_to_ptr.hbm [resolvable:$true] %s459
          %s461 = sshll.u32 [#allocation15], 4
          %s462 = int_to_ptr.vmem [resolvable:$true] %s461
          %467 = dma.hbm_to_vmem [thread:$0]  %s460, 512, %s462, [#allocation14], 128, 128, 8
        $region24: #{tpu_custom_call.1} parent=11 // pred_fallthru
          _
        // Predicated region
        $region25: #{tpu_custom_call.1} parent=11 // pred_check
          %p468 = pneg %p307
        $region26: #{tpu_custom_call.1} parent=11 // pred_check_branch
          %470 = sbr.rel (%p468) target = $region28
        $region27: #{tpu_custom_call.1} parent=11 // pred_region
          _
        $region28: #{tpu_custom_call.1} parent=11 // pred_fallthru
          _
        // Predicated region
        $region29: #{tpu_custom_call.1} parent=11 // pred_check
          %p471 = pneg %p328
        $region30: #{tpu_custom_call.1} parent=11 // pred_check_branch
          %473 = sbr.rel (%p471) target = $region32
        $region31: #{tpu_custom_call.1} parent=11 // pred_region
          %475 = vsyncadd [#allocation17], 0
          %s476 = sshll.u32 %s11, 4
          %s477 = int_to_ptr.hbm [resolvable:$true] %s476
          %s478 = sshll.u32 [#allocation16], 4
          %s479 = int_to_ptr.vmem [resolvable:$true] %s478
          %484 = dma.hbm_to_vmem [thread:$0]  %s477, 512, %s479, [#allocation17], 128, 128, 8
        $region32: #{tpu_custom_call.1} parent=11 // pred_fallthru
          _
        // Predicated region
        $region33: #{tpu_custom_call.1} parent=11 // pred_check
          %p485 = pneg %p349
        $region34: #{tpu_custom_call.1} parent=11 // pred_check_branch
          %487 = sbr.rel (%p485) target = $region36
        $region35: #{tpu_custom_call.1} parent=11 // pred_region
          _
        $region36: #{tpu_custom_call.1} parent=11 // pred_fallthru
          _
        // Predicated region
        $region37: #{tpu_custom_call.1} parent=11 // pred_check
          %p488 = pneg %p370
        $region38: #{tpu_custom_call.1} parent=11 // pred_check_branch
          %490 = sbr.rel (%p488) target = $region40
        $region39: #{tpu_custom_call.1} parent=11 // pred_region
          _
        $region40: #{tpu_custom_call.1} parent=11 // pred_fallthru
          _
      $region12: #{tpu_custom_call.1} parent=5 // pred_fallthru
        _
      %p491 = scmp.lt.s32.totalorder %s41, 2
      // Predicated region
      $region41: #{tpu_custom_call.1} parent=5 // pred_check
        %p492 = pneg %p491
      $region42: #{tpu_custom_call.1} parent=5 // pred_check_branch
        %494 = sbr.rel (%p492) target = $region44
      $region43: #{tpu_custom_call.1} parent=5 // pred_region
        // Predicated region
        $region45: #{tpu_custom_call.1} parent=43 // pred_check
          %p495 = pneg %p61
        $region46: #{tpu_custom_call.1} parent=43 // pred_check_branch
          %497 = sbr.rel (%p495) target = $region48
        $region47: #{tpu_custom_call.1} parent=43 // pred_region
          %s498 = sand.u32 %s51, 1
          %s499 = sand.u32 %s51, 1
          %s500 = smul.addr %s499, 32
          %s501 = scalar_lea.vmem [#allocation3], %s500
          %s502 = smul.addr %s41, 8
          %s503 = scalar_lea.vmem %s0, %s502
          // Predicated region
          $region49: #{tpu_custom_call.1} parent=47 // pred_check
            _
          $region50: #{tpu_custom_call.1} parent=47 // pred_check_branch
            %505 = sbr.rel (0) target = $region52
          $region51: #{tpu_custom_call.1} parent=47 // pred_region
            // Predicated region
            $region53: #{tpu_custom_call.1} parent=51 // pred_check
              _
            $region54: #{tpu_custom_call.1} parent=51 // pred_check_branch
              %507 = sbr.rel (0) target = $region56
            $region55: #{tpu_custom_call.1} parent=51 // pred_region
              // Predicated region
              $region68: #{tpu_custom_call.1} parent=55 // pred_check
                _
              $region69: #{tpu_custom_call.1} parent=55 // pred_check_branch
                %529 = sbr.rel (0) target = $region71
              $region70: #{tpu_custom_call.1} parent=55 // pred_region
                loop: start=0, step=1, limit=1
                $region72: #{tpu_custom_call.1} parent=70 // loop_pre_header
                  _
                $region73: #{tpu_custom_call.1} parent=70 // loop_header
                  %s531 = sphi 0, %s535
                  %p532 = scmp.ge.s32.totalorder %s531, 1
                  %s536 = sphi %s503, %s503
                  %s537 = sphi %s501, %s501
                $region74: #{tpu_custom_call.1} parent=70 // loop_header_branch
                  %534 = sbr.rel (%p532) target = $region78
                $region75: #{tpu_custom_call.1} parent=70 // loop_body
                  %v538 = vld [vmem:[%s536] sm:$0xff]
                  %539 = vst [vmem:[%s537] sm:$0xff] %v538
                  %v540 = vld [vmem:[%s536 + $0x10] sm:$0xff]
                  %541 = vst [vmem:[%s537 + $0x8] sm:$0xff] %v540
                  %v542 = vld [vmem:[%s536 + $0x20] sm:$0xff]
                  %543 = vst [vmem:[%s537 + $0x10] sm:$0xff] %v542
                  %v544 = vld [vmem:[%s536 + $0x30] sm:$0xff]
                  %545 = vst [vmem:[%s537 + $0x18] sm:$0xff] %v544
                $region76: #{tpu_custom_call.1} parent=70 // loop_footer
                  %s535 = sadd.s32 1, %s531
                $region77: #{tpu_custom_call.1} parent=70 // loop_footer_branch
                  %530 = sbr.rel target = $region73
                $region78: #{tpu_custom_call.1} parent=70 // loop_exit
                  _
              $region71: #{tpu_custom_call.1} parent=55 // pred_fallthru
                _
              // Predicated region
              $region79: #{tpu_custom_call.1} parent=55 // pred_check
                _
              $region80: #{tpu_custom_call.1} parent=55 // pred_check_branch
                %547 = sbr.rel target = $region82
              $region81: #{tpu_custom_call.1} parent=55 // pred_region
                _
              $region82: #{tpu_custom_call.1} parent=55 // pred_fallthru
                _
            $region56: #{tpu_custom_call.1} parent=51 // pred_fallthru
              _
            // Predicated region
            $region57: #{tpu_custom_call.1} parent=51 // pred_check
              _
            $region58: #{tpu_custom_call.1} parent=51 // pred_check_branch
              %509 = sbr.rel target = $region60
            $region59: #{tpu_custom_call.1} parent=51 // pred_region
              %s511 = ssub.s32 256, 1
              loop: start=0, step=1, limit=1
              $region61: #{tpu_custom_call.1} parent=59 // loop_pre_header
                _
              $region62: #{tpu_custom_call.1} parent=59 // loop_header
                %s513 = sphi 0, %s517
                %p514 = scmp.ge.s32.totalorder %s513, 1
                %s518 = sphi %s503, %s503
                %s519 = sphi %s501, %s501
              $region63: #{tpu_custom_call.1} parent=59 // loop_header_branch
                %516 = sbr.rel (%p514) target = $region67
              $region64: #{tpu_custom_call.1} parent=59 // loop_body
                %v520 = vld [vmem:[%s518] sm:%s511]
                %521 = vst [vmem:[%s519] sm:%s511] %v520
                %v522 = vld [vmem:[%s518 + $0x10] sm:%s511]
                %523 = vst [vmem:[%s519 + $0x8] sm:%s511] %v522
                %v524 = vld [vmem:[%s518 + $0x20] sm:%s511]
                %525 = vst [vmem:[%s519 + $0x10] sm:%s511] %v524
                %v526 = vld [vmem:[%s518 + $0x30] sm:%s511]
                %527 = vst [vmem:[%s519 + $0x18] sm:%s511] %v526
              $region65: #{tpu_custom_call.1} parent=59 // loop_footer
                %s517 = sadd.s32 1, %s513
              $region66: #{tpu_custom_call.1} parent=59 // loop_footer_branch
                %512 = sbr.rel target = $region62
              $region67: #{tpu_custom_call.1} parent=59 // loop_exit
                _
            $region60: #{tpu_custom_call.1} parent=51 // pred_fallthru
              _
          $region52: #{tpu_custom_call.1} parent=47 // pred_fallthru
            _
          %548 = vnop
        $region48: #{tpu_custom_call.1} parent=43 // pred_fallthru
          _
        // Predicated region
        $region83: #{tpu_custom_call.1} parent=43 // pred_check
          %p549 = pneg %p87
        $region84: #{tpu_custom_call.1} parent=43 // pred_check_branch
          %551 = sbr.rel (%p549) target = $region86
        $region85: #{tpu_custom_call.1} parent=43 // pred_region
          %s552 = sand.u32 %s77, 1
          %s553 = scalar_lea.sflag [#allocation5], %s552
          %s554 = sand.u32 %s77, 1
          %s555 = smul.addr %s554, 32
          %s556 = scalar_lea.vmem [#allocation4], %s555
          %558 = vsyncadd %s553, 0
          %s559 = smul.addr %s41, 8
          %s560 = scalar_lea.hbm %s1, %s559
          %s561 = sshll.u32 %s560, 4
          %s562 = int_to_ptr.hbm [resolvable:$true] %s561
          %s563 = sshll.u32 %s556, 4
          %s564 = int_to_ptr.vmem [resolvable:$true] %s563
          %569 = dma.hbm_to_vmem [thread:$0]  %s562, 512, %s564, %s553, 256, 128, 8
        $region86: #{tpu_custom_call.1} parent=43 // pred_fallthru
          _
        // Predicated region
        $region87: #{tpu_custom_call.1} parent=43 // pred_check
          %p570 = pneg %p113
        $region88: #{tpu_custom_call.1} parent=43 // pred_check_branch
          %572 = sbr.rel (%p570) target = $region90
        $region89: #{tpu_custom_call.1} parent=43 // pred_region
          %s573 = sand.u32 %s41, 1
          %s574 = scalar_lea.sflag [#allocation8], %s573
          %s575 = sand.u32 %s103, 1
          %s576 = smul.addr %s575, 32
          %s577 = scalar_lea.vmem [#allocation7], %s576
          %579 = vsyncadd %s574, 0
          %s580 = smul.addr %s41, 8
          %s581 = scalar_lea.hbm %s2, %s580
          %s582 = sshll.u32 %s581, 4
          %s583 = int_to_ptr.hbm [resolvable:$true] %s582
          %s584 = sshll.u32 %s577, 4
          %s585 = int_to_ptr.vmem [resolvable:$true] %s584
          %590 = dma.hbm_to_vmem [thread:$0]  %s583, 512, %s585, %s574, 256, 128, 8
        $region90: #{tpu_custom_call.1} parent=43 // pred_fallthru
          _
        // Predicated region
        $region91: #{tpu_custom_call.1} parent=43 // pred_check
          %p591 = pneg %p139
        $region92: #{tpu_custom_call.1} parent=43 // pred_check_branch
          %593 = sbr.rel (%p591) target = $region94
        $region93: #{tpu_custom_call.1} parent=43 // pred_region
          %s594 = sand.u32 %s41, 1
          %s595 = scalar_lea.sflag [#allocation8], %s594
          %s596 = sand.u32 %s129, 1
          %s597 = smul.addr %s596, 32
          %s598 = scalar_lea.vmem [#allocation9], %s597
          %600 = vsyncadd %s595, 0
          %s601 = smul.addr %s41, 8
          %s602 = scalar_lea.hbm %s3, %s601
          %s603 = sshll.u32 %s602, 4
          %s604 = int_to_ptr.hbm [resolvable:$true] %s603
          %s605 = sshll.u32 %s598, 4
          %s606 = int_to_ptr.vmem [resolvable:$true] %s605
          %611 = dma.hbm_to_vmem [thread:$0]  %s604, 512, %s606, %s595, 256, 128, 8
        $region94: #{tpu_custom_call.1} parent=43 // pred_fallthru
          _
        // Predicated region
        $region95: #{tpu_custom_call.1} parent=43 // pred_check
          %p612 = pneg %p165
        $region96: #{tpu_custom_call.1} parent=43 // pred_check_branch
          %614 = sbr.rel (%p612) target = $region98
        $region97: #{tpu_custom_call.1} parent=43 // pred_region
          %s615 = sand.u32 %s41, 1
          %s616 = scalar_lea.sflag [#allocation11], %s615
          %s617 = sand.u32 %s155, 1
          %s618 = smul.addr %s617, 32
          %s619 = scalar_lea.vmem [#allocation10], %s618
          %621 = vsyncadd %s616, 0
          %s622 = smul.addr %s41, 8
          %s623 = scalar_lea.hbm %s4, %s622
          %s624 = sshll.u32 %s623, 4
          %s625 = int_to_ptr.hbm [resolvable:$true] %s624
          %s626 = sshll.u32 %s619, 4
          %s627 = int_to_ptr.vmem [resolvable:$true] %s626
          %632 = dma.hbm_to_vmem [thread:$0]  %s625, 512, %s627, %s616, 256, 128, 8
        $region98: #{tpu_custom_call.1} parent=43 // pred_fallthru
          _
        // Predicated region
        $region99: #{tpu_custom_call.1} parent=43 // pred_check
          %p633 = pneg %p191
        $region100: #{tpu_custom_call.1} parent=43 // pred_check_branch
          %635 = sbr.rel (%p633) target = $region102
        $region101: #{tpu_custom_call.1} parent=43 // pred_region
          %s636 = sand.u32 %s41, 1
          %s637 = scalar_lea.sflag [#allocation11], %s636
          %s638 = sand.u32 %s181, 1
          %s639 = smul.addr %s638, 32
          %s640 = scalar_lea.vmem [#allocation12], %s639
          %642 = vsyncadd %s637, 0
          %s643 = smul.addr %s41, 8
          %s644 = scalar_lea.hbm %s5, %s643
          %s645 = sshll.u32 %s644, 4
          %s646 = int_to_ptr.hbm [resolvable:$true] %s645
          %s647 = sshll.u32 %s640, 4
          %s648 = int_to_ptr.vmem [resolvable:$true] %s647
          %653 = dma.hbm_to_vmem [thread:$0]  %s646, 512, %s648, %s637, 256, 128, 8
        $region102: #{tpu_custom_call.1} parent=43 // pred_fallthru
          _
        // Predicated region
        $region103: #{tpu_custom_call.1} parent=43 // pred_check
          %p654 = pneg %p217
        $region104: #{tpu_custom_call.1} parent=43 // pred_check_branch
          %656 = sbr.rel (%p654) target = $region106
        $region105: #{tpu_custom_call.1} parent=43 // pred_region
          %p657 = scmp.lt.s32.totalorder %s41, 1
          %s658 = scalar_select %p657, %s41, 1
          %s659 = scalar_lea.vmem %s6, %s658
        $region106: #{tpu_custom_call.1} parent=43 // pred_fallthru
          _
      $region44: #{tpu_custom_call.1} parent=5 // pred_fallthru
        _
      %p660 = scmp.le.s32.totalorder 1, %s41
      %p661 = scmp.lt.s32.totalorder %s41, 3
      %p662 = pnand %p660, %p661
      %p663 = pneg %p662
      // Predicated region
      $region107: #{tpu_custom_call.1} parent=5 // pred_check
        _
      $region108: #{tpu_custom_call.1} parent=5 // pred_check_branch
        %665 = sbr.rel (%p662) target = $region110
      $region109: #{tpu_custom_call.1} parent=5 // pred_region
        %s666 = ssub.s32 %s41, 1
        %s667 = sand.u32 %s54, 1
        %s668 = sand.u32 %s54, 1
        %s669 = smul.addr %s668, 32
        %s670 = scalar_lea.vmem [#allocation3], %s669
        // Predicated region
        $region111: #{tpu_custom_call.1} parent=109 // pred_check
          %p671 = pneg %p67
        $region112: #{tpu_custom_call.1} parent=109 // pred_check_branch
          %673 = sbr.rel (%p671) target = $region114
        $region113: #{tpu_custom_call.1} parent=109 // pred_region
          _
        $region114: #{tpu_custom_call.1} parent=109 // pred_fallthru
          _
        %s674 = sand.u32 %s80, 1
        %s675 = scalar_lea.sflag [#allocation5], %s674
        %s676 = sand.u32 %s80, 1
        %s677 = smul.addr %s676, 32
        %s678 = scalar_lea.vmem [#allocation4], %s677
        // Predicated region
        $region115: #{tpu_custom_call.1} parent=109 // pred_check
          %p679 = pneg %p93
        $region116: #{tpu_custom_call.1} parent=109 // pred_check_branch
          %681 = sbr.rel (%p679) target = $region118
        $region117: #{tpu_custom_call.1} parent=109 // pred_region
          %683 = dma.done %s675, 512
        $region118: #{tpu_custom_call.1} parent=109 // pred_fallthru
          _
        %s684 = sand.u32 %s46, 1
        %s685 = scalar_lea.sflag [#allocation8], %s684
        %s686 = sand.u32 %s106, 1
        %s687 = smul.addr %s686, 32
        %s688 = scalar_lea.vmem [#allocation7], %s687
        // Predicated region
        $region119: #{tpu_custom_call.1} parent=109 // pred_check
          %p689 = pneg %p119
        $region120: #{tpu_custom_call.1} parent=109 // pred_check_branch
          %691 = sbr.rel (%p689) target = $region122
        $region121: #{tpu_custom_call.1} parent=109 // pred_region
          %693 = dma.done %s685, 512
        $region122: #{tpu_custom_call.1} parent=109 // pred_fallthru
          _
        %s694 = sand.u32 %s46, 1
        %s695 = scalar_lea.sflag [#allocation8], %s694
        %s696 = sand.u32 %s132, 1
        %s697 = smul.addr %s696, 32
        %s698 = scalar_lea.vmem [#allocation9], %s697
        // Predicated region
        $region123: #{tpu_custom_call.1} parent=109 // pred_check
          %p699 = pneg %p145
        $region124: #{tpu_custom_call.1} parent=109 // pred_check_branch
          %701 = sbr.rel (%p699) target = $region126
        $region125: #{tpu_custom_call.1} parent=109 // pred_region
          %703 = dma.done %s695, 512
        $region126: #{tpu_custom_call.1} parent=109 // pred_fallthru
          _
        %s704 = sand.u32 %s46, 1
        %s705 = scalar_lea.sflag [#allocation11], %s704
        %s706 = sand.u32 %s158, 1
        %s707 = smul.addr %s706, 32
        %s708 = scalar_lea.vmem [#allocation10], %s707
        // Predicated region
        $region127: #{tpu_custom_call.1} parent=109 // pred_check
          %p709 = pneg %p171
        $region128: #{tpu_custom_call.1} parent=109 // pred_check_branch
          %711 = sbr.rel (%p709) target = $region130
        $region129: #{tpu_custom_call.1} parent=109 // pred_region
          %713 = dma.done %s705, 512
        $region130: #{tpu_custom_call.1} parent=109 // pred_fallthru
          _
        %s714 = sand.u32 %s46, 1
        %s715 = scalar_lea.sflag [#allocation11], %s714
        %s716 = sand.u32 %s184, 1
        %s717 = smul.addr %s716, 32
        %s718 = scalar_lea.vmem [#allocation12], %s717
        // Predicated region
        $region131: #{tpu_custom_call.1} parent=109 // pred_check
          %p719 = pneg %p197
        $region132: #{tpu_custom_call.1} parent=109 // pred_check_branch
          %721 = sbr.rel (%p719) target = $region134
        $region133: #{tpu_custom_call.1} parent=109 // pred_region
          %723 = dma.done %s715, 512
        $region134: #{tpu_custom_call.1} parent=109 // pred_fallthru
          _
        // Predicated region
        $region135: #{tpu_custom_call.1} parent=109 // pred_check
          %p724 = pneg %p244
        $region136: #{tpu_custom_call.1} parent=109 // pred_check_branch
          %726 = sbr.rel (%p724) target = $region138
        $region137: #{tpu_custom_call.1} parent=109 // pred_region
          %728 = dma.done [#allocation14], 512
        $region138: #{tpu_custom_call.1} parent=109 // pred_fallthru
          _
        // Predicated region
        $region139: #{tpu_custom_call.1} parent=109 // pred_check
          %p729 = pneg %p286
        $region140: #{tpu_custom_call.1} parent=109 // pred_check_branch
          %731 = sbr.rel (%p729) target = $region142
        $region141: #{tpu_custom_call.1} parent=109 // pred_region
          %733 = dma.done [#allocation14], 512
        $region142: #{tpu_custom_call.1} parent=109 // pred_fallthru
          _
        // Predicated region
        $region143: #{tpu_custom_call.1} parent=109 // pred_check
          %p734 = pneg %p328
        $region144: #{tpu_custom_call.1} parent=109 // pred_check_branch
          %736 = sbr.rel (%p734) target = $region146
        $region145: #{tpu_custom_call.1} parent=109 // pred_region
          %738 = dma.done [#allocation17], 512
        $region146: #{tpu_custom_call.1} parent=109 // pred_fallthru
          _
        %s739 = sand.u32 %s54, 1
        %s740 = sand.u32 %s54, 1
        %s741 = smul.addr %s740, 32
        %s742 = scalar_lea.vmem [#allocation3], %s741
        %p743 = pneg %p67
        %p744 = pneg %p64
        %s745 = sand.u32 %s80, 1
        %s746 = scalar_lea.sflag [#allocation5], %s745
        %s747 = sand.u32 %s80, 1
        %s748 = smul.addr %s747, 32
        %s749 = scalar_lea.vmem [#allocation4], %s748
        %p750 = pneg %p93
        %p751 = pneg %p90
        %s752 = sand.u32 %s46, 1
        %s753 = scalar_lea.sflag [#allocation8], %s752
        %s754 = sand.u32 %s106, 1
        %s755 = smul.addr %s754, 32
        %s756 = scalar_lea.vmem [#allocation7], %s755
        %p757 = pneg %p119
        %p758 = pneg %p116
        %s759 = sand.u32 %s46, 1
        %s760 = scalar_lea.sflag [#allocation8], %s759
        %s761 = sand.u32 %s132, 1
        %s762 = smul.addr %s761, 32
        %s763 = scalar_lea.vmem [#allocation9], %s762
        %p764 = pneg %p145
        %p765 = pneg %p142
        %s766 = sand.u32 %s46, 1
        %s767 = scalar_lea.sflag [#allocation11], %s766
        %s768 = sand.u32 %s158, 1
        %s769 = smul.addr %s768, 32
        %s770 = scalar_lea.vmem [#allocation10], %s769
        %p771 = pneg %p171
        %p772 = pneg %p168
        %s773 = sand.u32 %s46, 1
        %s774 = scalar_lea.sflag [#allocation11], %s773
        %s775 = sand.u32 %s184, 1
        %s776 = smul.addr %s775, 32
        %s777 = scalar_lea.vmem [#allocation12], %s776
        %p778 = pneg %p197
        %p779 = pneg %p194
        %p780 = scmp.lt.s32.totalorder %s46, 1
        %s781 = scalar_select %p780, %s46, 1
        %s782 = scalar_lea.vmem %s6, %s781
        %p783 = pneg %p223
        %p784 = pneg %p220
        %p785 = pneg %p244
        %p786 = pneg %p241
        %p787 = pneg %p265
        %p788 = pneg %p262
        %p789 = pneg %p286
        %p790 = pneg %p283
        %p791 = pneg %p307
        %p792 = pneg %p304
        %p793 = pneg %p328
        %p794 = pneg %p325
        %p795 = pneg %p349
        %p796 = pneg %p346
        %p797 = pneg %p370
        %p798 = pneg %p367
        %p799 = pneg %p396
        %p800 = pneg %p393
        %s801 = sand.u32 %s383, 1
        %s802 = scalar_lea.sflag [#allocation6], %s801
        %s803 = sand.u32 %s383, 1
        %s804 = scalar_lea.vmem [#allocation18], %s803
        %p805 = pneg %p422
        %p806 = pneg %p419
        %s807 = sand.u32 %s409, 1
        %s808 = scalar_lea.sflag [#allocation20], %s807
        %s809 = sand.u32 %s409, 1
        %s810 = scalar_lea.vmem [#allocation19], %s809
        %p811 = scmp.lt.s32.totalorder %s46, 1
        %s812 = scalar_select %p811, %s46, 1
        %s813 = scalar_lea.vmem %s6, %s812
        %v814 = vld [vmem:[#allocation13] sm:$0xff]
        %v815 = vld [vmem:[#allocation13 + $0x8] sm:$0xff]
        %v816 = vld [vmem:[#allocation13 + $0x10] sm:$0xff]
        %v817 = vld [vmem:[#allocation13 + $0x18] sm:$0xff]
        %v818 = vld [vmem:[%s670] sm:$0xff]
        %v819 = vld [vmem:[%s670 + $0x8] sm:$0xff]
        %v820 = vld [vmem:[%s670 + $0x10] sm:$0xff]
        %v821 = vld [vmem:[%s670 + $0x18] sm:$0xff]
        %v822 = vld [vmem:[%s8] sm:$0xff]
        %v823 = vld [vmem:[%s8 + $0x8] sm:$0xff]
        %v824 = vld [vmem:[%s8 + $0x10] sm:$0xff]
        %v825 = vld [vmem:[%s8 + $0x18] sm:$0xff]
        %827 = vset.pattern.permute.xlu0 0
        %828 = vperm.xlu0 %827, %v822
        %v829 = vpop.permute.xlu0 %828
        %832 = vset.pattern.permute.xlu0 0
        %833 = vperm.xlu0 %832, %v823
        %v834 = vpop.permute.xlu0 %833
        %837 = vset.pattern.permute.xlu0 0
        %838 = vperm.xlu0 %837, %v824
        %v839 = vpop.permute.xlu0 %838
        %842 = vset.pattern.permute.xlu0 0
        %843 = vperm.xlu0 %842, %v825
        %v844 = vpop.permute.xlu0 %843
        %vm846 = vcmask 261120
        %v848 = vsel %vm846, %v814, 0
        %v851 = vsel %vm846, %v815, 0
        %v854 = vsel %vm846, %v816, 0
        %v857 = vsel %vm846, %v817, 0
        %859 = vmatpush.msra.mxu0 0.0
        %860 = vmatpush.msra.mxu0 0.0
        %861 = vmatpush.msra.mxu0 0.0
        %862 = vmatpush.msra.mxu0 0.0
        %863 = vmatpush.msra.mxu0 0.0
        %864 = vmatpush.msra.mxu0 0.0
        %865 = vmatpush.msra.mxu0 0.0
        %866 = vmatpush.msra.mxu0 0.0
        %867 = vmatpush.msra.mxu0 0.0
        %868 = vmatpush.msra.mxu0 0.0
        %869 = vmatpush.msra.mxu0 0.0
        %870 = vmatpush.msra.mxu0 0.0
        %871 = vmatpush.msra.mxu0 %v821
        %872 = vmatpush.msra.mxu0 %v820
        %873 = vmatpush.msra.mxu0 %v819
        %874 = vmatpush.msra.mxu0 %v818
        %875 = vmatmul.f32.gmra.mxu0 %v848
        %v876 = vpop.f32.mrf.mxu0
        %v877 = vadd.f32 %v829, %v876
        %878 = vmatmul.f32.gmra.mxu0 %v851
        %v879 = vpop.f32.mrf.mxu0
        %v880 = vadd.f32 %v834, %v879
        %881 = vmatmul.f32.gmra.mxu0 %v854
        %v882 = vpop.f32.mrf.mxu0
        %v883 = vadd.f32 %v839, %v882
        %884 = vmatmul.f32.gmra.mxu0 %v857
        %v885 = vpop.f32.mrf.mxu0
        %v886 = vadd.f32 %v844, %v885
        %887 = vdwg.mxu0
        %v888 = vld [vmem:[%s678] sm:$0xff]
        %v889 = vld [vmem:[%s678 + $0x8] sm:$0xff]
        %v890 = vld [vmem:[%s678 + $0x10] sm:$0xff]
        %v891 = vld [vmem:[%s678 + $0x18] sm:$0xff]
        %892 = vmatpush.msra.mxu0 0.0
        %893 = vmatpush.msra.mxu0 0.0
        %894 = vmatpush.msra.mxu0 0.0
        %895 = vmatpush.msra.mxu0 0.0
        %896 = vmatpush.msra.mxu0 0.0
        %897 = vmatpush.msra.mxu0 0.0
        %898 = vmatpush.msra.mxu0 0.0
        %899 = vmatpush.msra.mxu0 0.0
        %900 = vmatpush.msra.mxu0 0.0
        %901 = vmatpush.msra.mxu0 0.0
        %902 = vmatpush.msra.mxu0 0.0
        %903 = vmatpush.msra.mxu0 0.0
        %904 = vmatpush.msra.mxu0 %v891
        %905 = vmatpush.msra.mxu0 %v890
        %906 = vmatpush.msra.mxu0 %v889
        %907 = vmatpush.msra.mxu0 %v888
        %908 = vmatmul.f32.gmra.mxu0 %v848
        %v909 = vpop.f32.mrf.mxu0
        %v910 = vadd.f32 %v829, %v909
        %911 = vmatmul.f32.gmra.mxu0 %v851
        %v912 = vpop.f32.mrf.mxu0
        %v913 = vadd.f32 %v834, %v912
        %914 = vmatmul.f32.gmra.mxu0 %v854
        %v915 = vpop.f32.mrf.mxu0
        %v916 = vadd.f32 %v839, %v915
        %917 = vmatmul.f32.gmra.mxu0 %v857
        %v918 = vpop.f32.mrf.mxu0
        %v919 = vadd.f32 %v844, %v918
        %920 = vdwg.mxu0
        %v921 = vld [vmem:[%s688] sm:$0xff]
        %v922 = vld [vmem:[%s688 + $0x8] sm:$0xff]
        %v923 = vld [vmem:[%s688 + $0x10] sm:$0xff]
        %v924 = vld [vmem:[%s688 + $0x18] sm:$0xff]
        %925 = vmatpush.msra.mxu0 0.0
        %926 = vmatpush.msra.mxu0 0.0
        %927 = vmatpush.msra.mxu0 0.0
        %928 = vmatpush.msra.mxu0 0.0
        %929 = vmatpush.msra.mxu0 0.0
        %930 = vmatpush.msra.mxu0 0.0
        %931 = vmatpush.msra.mxu0 0.0
        %932 = vmatpush.msra.mxu0 0.0
        %933 = vmatpush.msra.mxu0 0.0
        %934 = vmatpush.msra.mxu0 0.0
        %935 = vmatpush.msra.mxu0 0.0
        %936 = vmatpush.msra.mxu0 0.0
        %937 = vmatpush.msra.mxu0 %v924
        %938 = vmatpush.msra.mxu0 %v923
        %939 = vmatpush.msra.mxu0 %v922
        %940 = vmatpush.msra.mxu0 %v921
        %941 = vmatmul.f32.gmra.mxu0 %v848
        %v942 = vpop.f32.mrf.mxu0
        %v943 = vadd.f32 %v829, %v942
        %944 = vmatmul.f32.gmra.mxu0 %v851
        %v945 = vpop.f32.mrf.mxu0
        %v946 = vadd.f32 %v834, %v945
        %947 = vmatmul.f32.gmra.mxu0 %v854
        %v948 = vpop.f32.mrf.mxu0
        %v949 = vadd.f32 %v839, %v948
        %950 = vmatmul.f32.gmra.mxu0 %v857
        %v951 = vpop.f32.mrf.mxu0
        %v952 = vadd.f32 %v844, %v951
        %953 = vdwg.mxu0
        %v954 = vld [vmem:[#allocation15] sm:$0xff]
        %v955 = vld [vmem:[#allocation15 + $0x8] sm:$0xff]
        %v956 = vld [vmem:[#allocation15 + $0x10] sm:$0xff]
        %v957 = vld [vmem:[#allocation15 + $0x18] sm:$0xff]
        %v958 = vld [vmem:[%s698] sm:$0xff]
        %v959 = vld [vmem:[%s698 + $0x8] sm:$0xff]
        %v960 = vld [vmem:[%s698 + $0x10] sm:$0xff]
        %v961 = vld [vmem:[%s698 + $0x18] sm:$0xff]
        %v962 = vld [vmem:[%s10] sm:$0xff]
        %v963 = vld [vmem:[%s10 + $0x8] sm:$0xff]
        %v964 = vld [vmem:[%s10 + $0x10] sm:$0xff]
        %v965 = vld [vmem:[%s10 + $0x18] sm:$0xff]
        %967 = vset.pattern.permute.xlu0 0
        %968 = vperm.xlu0 %967, %v962
        %v969 = vpop.permute.xlu0 %968
        %972 = vset.pattern.permute.xlu0 0
        %973 = vperm.xlu0 %972, %v963
        %v974 = vpop.permute.xlu0 %973
        %977 = vset.pattern.permute.xlu0 0
        %978 = vperm.xlu0 %977, %v964
        %v979 = vpop.permute.xlu0 %978
        %982 = vset.pattern.permute.xlu0 0
        %983 = vperm.xlu0 %982, %v965
        %v984 = vpop.permute.xlu0 %983
        %v987 = vsel %vm846, %v954, 0
        %v990 = vsel %vm846, %v955, 0
        %v993 = vsel %vm846, %v956, 0
        %v996 = vsel %vm846, %v957, 0
        %998 = vmatpush.msra.mxu0 0.0
        %999 = vmatpush.msra.mxu0 0.0
        %1000 = vmatpush.msra.mxu0 0.0
        %1001 = vmatpush.msra.mxu0 0.0
        %1002 = vmatpush.msra.mxu0 0.0
        %1003 = vmatpush.msra.mxu0 0.0
        %1004 = vmatpush.msra.mxu0 0.0
        %1005 = vmatpush.msra.mxu0 0.0
        %1006 = vmatpush.msra.mxu0 0.0
        %1007 = vmatpush.msra.mxu0 0.0
        %1008 = vmatpush.msra.mxu0 0.0
        %1009 = vmatpush.msra.mxu0 0.0
        %1010 = vmatpush.msra.mxu0 %v961
        %1011 = vmatpush.msra.mxu0 %v960
        %1012 = vmatpush.msra.mxu0 %v959
        %1013 = vmatpush.msra.mxu0 %v958
        %1014 = vmatmul.f32.gmra.mxu0 %v987
        %v1015 = vpop.f32.mrf.mxu0
        %v1016 = vadd.f32 %v969, %v1015
        %1017 = vmatmul.f32.gmra.mxu0 %v990
        %v1018 = vpop.f32.mrf.mxu0
        %v1019 = vadd.f32 %v974, %v1018
        %1020 = vmatmul.f32.gmra.mxu0 %v993
        %v1021 = vpop.f32.mrf.mxu0
        %v1022 = vadd.f32 %v979, %v1021
        %1023 = vmatmul.f32.gmra.mxu0 %v996
        %v1024 = vpop.f32.mrf.mxu0
        %v1025 = vadd.f32 %v984, %v1024
        %1026 = vdwg.mxu0
        %v1027 = vld [vmem:[%s708] sm:$0xff]
        %v1028 = vld [vmem:[%s708 + $0x8] sm:$0xff]
        %v1029 = vld [vmem:[%s708 + $0x10] sm:$0xff]
        %v1030 = vld [vmem:[%s708 + $0x18] sm:$0xff]
        %1031 = vmatpush.msra.mxu0 0.0
        %1032 = vmatpush.msra.mxu0 0.0
        %1033 = vmatpush.msra.mxu0 0.0
        %1034 = vmatpush.msra.mxu0 0.0
        %1035 = vmatpush.msra.mxu0 0.0
        %1036 = vmatpush.msra.mxu0 0.0
        %1037 = vmatpush.msra.mxu0 0.0
        %1038 = vmatpush.msra.mxu0 0.0
        %1039 = vmatpush.msra.mxu0 0.0
        %1040 = vmatpush.msra.mxu0 0.0
        %1041 = vmatpush.msra.mxu0 0.0
        %1042 = vmatpush.msra.mxu0 0.0
        %1043 = vmatpush.msra.mxu0 %v1030
        %1044 = vmatpush.msra.mxu0 %v1029
        %1045 = vmatpush.msra.mxu0 %v1028
        %1046 = vmatpush.msra.mxu0 %v1027
        %1047 = vmatmul.f32.gmra.mxu0 %v987
        %v1048 = vpop.f32.mrf.mxu0
        %v1049 = vadd.f32 %v969, %v1048
        %1050 = vmatmul.f32.gmra.mxu0 %v990
        %v1051 = vpop.f32.mrf.mxu0
        %v1052 = vadd.f32 %v974, %v1051
        %1053 = vmatmul.f32.gmra.mxu0 %v993
        %v1054 = vpop.f32.mrf.mxu0
        %v1055 = vadd.f32 %v979, %v1054
        %1056 = vmatmul.f32.gmra.mxu0 %v996
        %v1057 = vpop.f32.mrf.mxu0
        %v1058 = vadd.f32 %v984, %v1057
        %1059 = vdwg.mxu0
        %v1060 = vld [vmem:[%s718] sm:$0xff]
        %v1061 = vld [vmem:[%s718 + $0x8] sm:$0xff]
        %v1062 = vld [vmem:[%s718 + $0x10] sm:$0xff]
        %v1063 = vld [vmem:[%s718 + $0x18] sm:$0xff]
        %v1064 = vld [vmem:[#allocation16] sm:$0xff]
        %v1065 = vld [vmem:[#allocation16 + $0x8] sm:$0xff]
        %v1066 = vld [vmem:[#allocation16 + $0x10] sm:$0xff]
        %v1067 = vld [vmem:[#allocation16 + $0x18] sm:$0xff]
        %vm1068 = vcmask 785408
        %v1070 = vsel %vm1068, %v1064, 0
        %v1073 = vsel %vm1068, %v1065, 0
        %v1076 = vsel %vm1068, %v1066, 0
        %v1079 = vsel %vm1068, %v1067, 0
        %1081 = vmatpush.msra.mxu0 0.0
        %1082 = vmatpush.msra.mxu0 0.0
        %1083 = vmatpush.msra.mxu0 0.0
        %1084 = vmatpush.msra.mxu0 0.0
        %1085 = vmatpush.msra.mxu0 %v919
        %1086 = vmatpush.msra.mxu0 %v916
        %1087 = vmatpush.msra.mxu0 %v913
        %1088 = vmatpush.msra.mxu0 %v910
        %1089 = vmatpush.msra.mxu0 %v1025
        %1090 = vmatpush.msra.mxu0 %v1022
        %1091 = vmatpush.msra.mxu0 %v1019
        %1092 = vmatpush.msra.mxu0 %v1016
        %1093 = vmatpush.msra.mxu0 %v886
        %1094 = vmatpush.msra.mxu0 %v883
        %1095 = vmatpush.msra.mxu0 %v880
        %1096 = vmatpush.msra.mxu0 %v877
        %1097 = vmatmul.f32.gmra.mxu0 %v1070
        %v1098 = vpop.f32.mrf.mxu0
        %v1099 = vadd.f32 %v1060, %v1098
        %1100 = vmatmul.f32.gmra.mxu0 %v1073
        %v1101 = vpop.f32.mrf.mxu0
        %v1102 = vadd.f32 %v1061, %v1101
        %1103 = vmatmul.f32.gmra.mxu0 %v1076
        %v1104 = vpop.f32.mrf.mxu0
        %v1105 = vadd.f32 %v1062, %v1104
        %1106 = vmatmul.f32.gmra.mxu0 %v1079
        %v1107 = vpop.f32.mrf.mxu0
        %v1108 = vadd.f32 %v1063, %v1107
        %1109 = vdwg.mxu0
        %v1110 = vmax.f32 %v1099, 0.0
        %v1111 = vmax.f32 %v1102, 0.0
        %v1112 = vmax.f32 %v1105, 0.0
        %v1113 = vmax.f32 %v1108, 0.0
        %v1114 = vld [vmem:[%s12] sm:$0x1]
        %v1115 = vld [vmem:[#allocation2] sm:$0x1]
        %1117 = vset.pattern.permute.xlu0 0
        %1118 = vperm.xlu0 %1117, %v1115
        %v1119 = vpop.permute.xlu0 %1118
        %v1121 = vperm.slane %v1119, 0
        %v1123 = vsel %vm846, %v1114, 0
        %1125 = vmatpush.msra.mxu0 0.0
        %1126 = vmatpush.msra.mxu0 0.0
        %1127 = vmatpush.msra.mxu0 0.0
        %1128 = vmatpush.msra.mxu0 0.0
        %1129 = vmatpush.msra.mxu0 0.0
        %1130 = vmatpush.msra.mxu0 0.0
        %1131 = vmatpush.msra.mxu0 0.0
        %1132 = vmatpush.msra.mxu0 0.0
        %1133 = vmatpush.msra.mxu0 0.0
        %1134 = vmatpush.msra.mxu0 0.0
        %1135 = vmatpush.msra.mxu0 0.0
        %1136 = vmatpush.msra.mxu0 0.0
        %1137 = vmatpush.msra.mxu0 %v1113
        %1138 = vmatpush.msra.mxu0 %v1112
        %1139 = vmatpush.msra.mxu0 %v1111
        %1140 = vmatpush.msra.mxu0 %v1110
        %1141 = vmatmul.f32.gmra.mxu0 %v1123
        %v1142 = vpop.f32.mrf.mxu0
        %v1143 = vadd.f32 %v1121, %v1142
        %1144 = vdwg.mxu0
        %1145 = vst [vmem:[%s804] sm:$0x1] %v1143
        %v1146 = vld [vmem:[#allocation16] sm:$0xff]
        %v1147 = vld [vmem:[#allocation16 + $0x8] sm:$0xff]
        %v1148 = vld [vmem:[#allocation16 + $0x10] sm:$0xff]
        %v1149 = vld [vmem:[#allocation16 + $0x18] sm:$0xff]
        %v1151 = vsel %vm1068, %v1146, 0
        %v1154 = vsel %vm1068, %v1147, 0
        %v1157 = vsel %vm1068, %v1148, 0
        %v1160 = vsel %vm1068, %v1149, 0
        %1162 = vmatpush.msra.mxu0 0.0
        %1163 = vmatpush.msra.mxu0 0.0
        %1164 = vmatpush.msra.mxu0 0.0
        %1165 = vmatpush.msra.mxu0 0.0
        %1166 = vmatpush.msra.mxu0 %v952
        %1167 = vmatpush.msra.mxu0 %v949
        %1168 = vmatpush.msra.mxu0 %v946
        %1169 = vmatpush.msra.mxu0 %v943
        %1170 = vmatpush.msra.mxu0 %v1058
        %1171 = vmatpush.msra.mxu0 %v1055
        %1172 = vmatpush.msra.mxu0 %v1052
        %1173 = vmatpush.msra.mxu0 %v1049
        %1174 = vmatpush.msra.mxu0 %v919
        %1175 = vmatpush.msra.mxu0 %v916
        %1176 = vmatpush.msra.mxu0 %v913
        %1177 = vmatpush.msra.mxu0 %v910
        %1178 = vmatmul.f32.gmra.mxu0 %v1151
        %v1179 = vpop.f32.mrf.mxu0
        %v1180 = vadd.f32 %v1060, %v1179
        %1181 = vmatmul.f32.gmra.mxu0 %v1154
        %v1182 = vpop.f32.mrf.mxu0
        %v1183 = vadd.f32 %v1061, %v1182
        %1184 = vmatmul.f32.gmra.mxu0 %v1157
        %v1185 = vpop.f32.mrf.mxu0
        %v1186 = vadd.f32 %v1062, %v1185
        %1187 = vmatmul.f32.gmra.mxu0 %v1160
        %v1188 = vpop.f32.mrf.mxu0
        %v1189 = vadd.f32 %v1063, %v1188
        %1190 = vdwg.mxu0
        %v1191 = vmax.f32 %v1180, 0.0
        %v1192 = vmax.f32 %v1183, 0.0
        %v1193 = vmax.f32 %v1186, 0.0
        %v1194 = vmax.f32 %v1189, 0.0
        %v1195 = vld [vmem:[%s12] sm:$0x1]
        %v1196 = vld [vmem:[#allocation2] sm:$0x1]
        %1198 = vset.pattern.permute.xlu0 0
        %1199 = vperm.xlu0 %1198, %v1196
        %v1200 = vpop.permute.xlu0 %1199
        %v1202 = vperm.slane %v1200, 0
        %v1204 = vsel %vm846, %v1195, 0
        %1206 = vmatpush.msra.mxu0 0.0
        %1207 = vmatpush.msra.mxu0 0.0
        %1208 = vmatpush.msra.mxu0 0.0
        %1209 = vmatpush.msra.mxu0 0.0
        %1210 = vmatpush.msra.mxu0 0.0
        %1211 = vmatpush.msra.mxu0 0.0
        %1212 = vmatpush.msra.mxu0 0.0
        %1213 = vmatpush.msra.mxu0 0.0
        %1214 = vmatpush.msra.mxu0 0.0
        %1215 = vmatpush.msra.mxu0 0.0
        %1216 = vmatpush.msra.mxu0 0.0
        %1217 = vmatpush.msra.mxu0 0.0
        %1218 = vmatpush.msra.mxu0 %v1194
        %1219 = vmatpush.msra.mxu0 %v1193
        %1220 = vmatpush.msra.mxu0 %v1192
        %1221 = vmatpush.msra.mxu0 %v1191
        %1222 = vmatmul.f32.gmra.mxu0 %v1204
        %v1223 = vpop.f32.mrf.mxu0
        %v1224 = vadd.f32 %v1202, %v1223
        %1225 = vdwg.mxu0
        %v1226 = vld [vmem:[%s813] sm:$0x1]
        %v1227 = vmul.f32 %v1224, %v1226
        %1228 = vst [vmem:[%s810] sm:$0x1] %v1227
        %s1229 = sand.u32 %s383, 1
        %s1230 = scalar_lea.sflag [#allocation6], %s1229
        %s1231 = sand.u32 %s383, 1
        %s1232 = scalar_lea.vmem [#allocation18], %s1231
        %s1233 = sand.u32 %s409, 1
        %s1234 = scalar_lea.sflag [#allocation20], %s1233
        %s1235 = sand.u32 %s409, 1
        %s1236 = scalar_lea.vmem [#allocation19], %s1235
        // Predicated region
        $region147: #{tpu_custom_call.1} parent=109 // pred_check
          %p1237 = pneg %p393
        $region148: #{tpu_custom_call.1} parent=109 // pred_check_branch
          %1239 = sbr.rel (%p1237) target = $region150
        $region149: #{tpu_custom_call.1} parent=109 // pred_region
          %1241 = vsyncadd %s1230, 0
          %s1242 = scalar_lea.hbm %s14, %s46
          %s1244 = sshll.u32 %s1232, 4
          %s1245 = int_to_ptr.vmem [resolvable:$true] %s1244
          %s1246 = sshll.u32 %s1242, 4
          %s1247 = int_to_ptr.hbm [resolvable:$true] %s1246
          %1249 = dma.vmem_to_hbm [thread:$0]  %s1245, 16, %s1247, %s1230
        $region150: #{tpu_custom_call.1} parent=109 // pred_fallthru
          _
        // Predicated region
        $region151: #{tpu_custom_call.1} parent=109 // pred_check
          %p1250 = pneg %p419
        $region152: #{tpu_custom_call.1} parent=109 // pred_check_branch
          %1252 = sbr.rel (%p1250) target = $region154
        $region153: #{tpu_custom_call.1} parent=109 // pred_region
          %1254 = vsyncadd %s1234, 0
          %s1255 = scalar_lea.hbm %s15, %s46
          %s1257 = sshll.u32 %s1236, 4
          %s1258 = int_to_ptr.vmem [resolvable:$true] %s1257
          %s1259 = sshll.u32 %s1255, 4
          %s1260 = int_to_ptr.hbm [resolvable:$true] %s1259
          %1262 = dma.vmem_to_hbm [thread:$0]  %s1258, 16, %s1260, %s1234
        $region154: #{tpu_custom_call.1} parent=109 // pred_fallthru
          _
      $region110: #{tpu_custom_call.1} parent=5 // pred_fallthru
        _
      %p1263 = scmp.le.s32.totalorder 2, %s41
      // Predicated region
      $region155: #{tpu_custom_call.1} parent=5 // pred_check
        %p1264 = pneg %p1263
      $region156: #{tpu_custom_call.1} parent=5 // pred_check_branch
        %1266 = sbr.rel (%p1264) target = $region158
      $region157: #{tpu_custom_call.1} parent=5 // pred_region
        %s1267 = ssub.s32 %s41, 2
        // Predicated region
        $region159: #{tpu_custom_call.1} parent=157 // pred_check
          %p1268 = pneg %p399
        $region160: #{tpu_custom_call.1} parent=157 // pred_check_branch
          %1270 = sbr.rel (%p1268) target = $region162
        $region161: #{tpu_custom_call.1} parent=157 // pred_region
          %s1271 = sand.u32 %s384, 1
          %s1272 = scalar_lea.sflag [#allocation6], %s1271
          %s1273 = sand.u32 %s384, 1
          %s1274 = scalar_lea.vmem [#allocation18], %s1273
          %1276 = dma.done %s1272, 16
        $region162: #{tpu_custom_call.1} parent=157 // pred_fallthru
          _
        // Predicated region
        $region163: #{tpu_custom_call.1} parent=157 // pred_check
          %p1277 = pneg %p425
        $region164: #{tpu_custom_call.1} parent=157 // pred_check_branch
          %1279 = sbr.rel (%p1277) target = $region166
        $region165: #{tpu_custom_call.1} parent=157 // pred_region
          %s1280 = sand.u32 %s410, 1
          %s1281 = scalar_lea.sflag [#allocation20], %s1280
          %s1282 = sand.u32 %s410, 1
          %s1283 = scalar_lea.vmem [#allocation19], %s1282
          %1285 = dma.done %s1281, 16
        $region166: #{tpu_custom_call.1} parent=157 // pred_fallthru
          _
      $region158: #{tpu_custom_call.1} parent=5 // pred_fallthru
        _
    $region6: #{tpu_custom_call.1} parent=1 // loop_footer
      %s45 = sadd.s32 1, %s41
    $region7: #{tpu_custom_call.1} parent=1 // loop_footer_branch
      %40 = sbr.rel target = $region3
    $region8: #{tpu_custom_call.1} parent=1 // loop_exit
      _
    %1286 = vsyncpa [#allocation5], 1
    %s1287 = scalar_lea.sflag [#allocation5], 1
    %1288 = vsyncpa %s1287, 1
    %1289 = vsyncpa [#allocation8], 1
    %s1290 = scalar_lea.sflag [#allocation8], 1
    %1291 = vsyncpa %s1290, 1
    %1292 = vsyncpa [#allocation11], 1
    %s1293 = scalar_lea.sflag [#allocation11], 1
    %1294 = vsyncpa %s1293, 1
    %1295 = vsyncpa [#allocation14], 1
    %1296 = vsyncpa [#allocation17], 1
    %1297 = vsyncpa [#allocation6], 1
    %s1298 = scalar_lea.sflag [#allocation6], 1
    %1299 = vsyncpa %s1298, 1
    %1300 = vsyncpa [#allocation20], 1
    %s1301 = scalar_lea.sflag [#allocation20], 1
    %1302 = vsyncpa %s1301, 1

</llo_original>
